<compile_context>
chip_gen: v6e
topology: v6e:2x2x1
jax: 0.10.0
libtpu: 0.0.40
codegen_flags: <defaults>
</compile_context>

<pallas_src>
import functools
import math

import jax
import jax.numpy as jnp
from jax import lax
from jax.experimental import pallas as pl
from jax.experimental.pallas import tpu as pltpu


def _round_up(x, m):
    return (x + m - 1) // m * m


def _cdiv(a, b):
    return (a + b - 1) // b


def _vmem_capacity_bytes():
    try:
        return int(pltpu.get_tpu_info().vmem_capacity_bytes)
    except Exception:
        return 64 * 1024 * 1024  # conservative: v7x per-TensorCore VMEM


def _const_index_map(rank):
    return lambda i: (0,) * rank


def _mlp_kernel(x_ref, w1_ref, b1_ref, w2_ref, b2_ref, o_ref, acc_ref, *,
                n_h, unroll):
    # fc2 bias folded into the accumulator init: one hoisted broadcast, no
    # final (tm, Ep) elementwise pass.
    acc_ref[...] = jnp.broadcast_to(b2_ref[...], acc_ref.shape)

    def body(h, carry):
        w1c = w1_ref[h]                      # (Ep, th)
        b1c = b1_ref[h]                      # (1, th) f32
        w2c = w2_ref[h]                      # (th, Ep)
        # fc1 chunk: f32 accumulation on the MXU; bias + ReLU on the VPU.
        hid = jnp.dot(x_ref[...], w1c, preferred_element_type=jnp.float32)
        hid = jnp.maximum(hid + b1c, 0.0)
        # fc2 chunk: feed the MXU in the weight dtype (no-op for f32 weights;
        # with bf16 weights this trades a little activation precision for the
        # fast MXU path -- intentional, accumulation stays f32).
        acc_ref[...] += jnp.dot(hid.astype(w2c.dtype), w2c,
                                preferred_element_type=jnp.float32)
        return carry

    lax.fori_loop(0, n_h, body, 0, unroll=unroll)
    o_ref[...] = acc_ref[...].astype(o_ref.dtype)


def prepare_mlp_params(w1, b1, w2, b2, *, lane_align=256, tile_h=512,
                       compute_dtype=None):
    """Pad / cast / reshape parameters once, off the per-call path.

    w1: (embed, mlp), w2: (mlp, embed) -- (in, out) layout, i.e. the transpose
    of PyTorch nn.Linear's (out, in) weight, so the kernel does plain `x @ w`.
    lane_align=256 matches the v6e/v7x 256x256 MXU tile; use 128 on v5e if the
    padding overhead matters (its MXUs are 128x128).
    """
    embed, mlp = w1.shape
    assert w2.shape == (mlp, embed)
    Ep = _round_up(embed, lane_align)
    Hp0 = _round_up(mlp, lane_align)
    th = min(_round_up(tile_h, lane_align), Hp0)
    Hp = _round_up(Hp0, th)
    n_h = Hp // th

    wdt = compute_dtype if compute_dtype is not None else w1.dtype
    w1p = jnp.pad(w1.astype(wdt), ((0, Ep - embed), (0, Hp - mlp)))
    w1p = w1p.reshape(Ep, n_h, th).transpose(1, 0, 2)          # (n_h, Ep, th)
    w2p = jnp.pad(w2.astype(wdt), ((0, Hp - mlp), (0, Ep - embed)))
    w2p = w2p.reshape(n_h, th, Ep)                             # (n_h, th, Ep)
    b1p = jnp.pad(b1.astype(jnp.float32), (0, Hp - mlp)).reshape(n_h, 1, th)
    b2p = jnp.pad(b2.astype(jnp.float32), (0, Ep - embed)).reshape(1, Ep)

    meta = dict(embed=embed, mlp=mlp, Ep=Ep, Hp=Hp, th=th, n_h=n_h,
                compute_dtype=compute_dtype)
    return (w1p, b1p, w2p, b2p), meta


def mlp_pallas(x, params, meta, *, tile_m=256):
    """x: (..., embed) -> (..., embed). params/meta from prepare_mlp_params."""
    w1p, b1p, w2p, b2p = params
    embed = meta["embed"]
    Ep, Hp, th, n_h = meta["Ep"], meta["Hp"], meta["th"], meta["n_h"]
    assert x.shape[-1] == embed
    lead = x.shape[:-1]
    out_dtype = x.dtype

    cdt = meta["compute_dtype"]
    if cdt is not None:
        x = x.astype(cdt)

    M = int(math.prod(lead))
    # Balanced M tiling: minimal padding, and >=2 tiles whenever M >= 16 so
    # the "parallel" axis can shard across v7x's two TensorCores.
    n_m = max(_cdiv(M, tile_m), 2 if M >= 16 else 1)
    tm = _round_up(_cdiv(M, n_m), 8)

    # Per-generation VMEM budget with headroom for compiler scratch/spill.
    cap = int(_vmem_capacity_bytes() * 0.85)
    witem = jnp.dtype(w1p.dtype).itemsize
    xitem = jnp.dtype(x.dtype).itemsize
    oitem = jnp.dtype(out_dtype).itemsize

    def plan_bytes(tm_):
        weights = 2 * Ep * Hp * witem + (Hp + Ep) * 4   # single-buffered residents
        tiles = 2 * tm_ * Ep * (xitem + oitem)          # double-buffered x / out
        scratch = tm_ * Ep * 4                          # f32 accumulator
        hidden = 2 * tm_ * th * 4                       # per-chunk f32 hidden (+slack)
        return weights + tiles + scratch + hidden

    while plan_bytes(tm) > cap and tm > 8:
        tm = max(8, _round_up(tm // 2, 8))
    # TODO(synk): if the resident weights alone exceed the cap (very large
    # embed*mlp), stream H-chunks of w1/w2 from HBM via a second grid axis
    # instead of keeping them fully VMEM-resident.

    n_m = _cdiv(M, tm)
    Mp = n_m * tm

    x2d = jnp.pad(x.reshape(M, embed), ((0, Mp - M), (0, Ep - embed)))

    vmem_limit = min(cap, max(int(plan_bytes(tm) * 3 // 2), 16 * 1024 * 1024))

    cost = pl.CostEstimate(
        flops=4 * M * embed * meta["mlp"],
        transcendentals=0,
        bytes_accessed=(Mp * Ep * xitem + Mp * Ep * oitem
                        + 2 * Ep * Hp * witem + (Hp + Ep) * 4),
    )

    kernel = functools.partial(_mlp_kernel, n_h=n_h, unroll=(n_h <= 8))

    def build(single_buffer_weights):
        if single_buffer_weights:
            def resident(shape):
                return pl.BlockSpec(shape, _const_index_map(len(shape)),
                                    pipeline_mode=pl.Buffered(1))
        else:
            def resident(shape):
                return pl.BlockSpec(shape, _const_index_map(len(shape)))
        return pl.pallas_call(
            kernel,
            out_shape=jax.ShapeDtypeStruct((Mp, Ep), out_dtype),
            grid_spec=pltpu.PrefetchScalarGridSpec(
                num_scalar_prefetch=0,
                grid=(n_m,),
                in_specs=[
                    pl.BlockSpec((tm, Ep), lambda i: (i, 0)),   # x tile (pipelined)
                    resident((n_h, Ep, th)),                    # w1 chunks (resident)
                    resident((n_h, 1, th)),                     # b1 chunks (resident)
                    resident((n_h, th, Ep)),                    # w2 chunks (resident)
                    resident((1, Ep)),                          # b2 (resident)
                ],
                out_specs=pl.BlockSpec((tm, Ep), lambda i: (i, 0)),
                scratch_shapes=[pltpu.VMEM((tm, Ep), jnp.float32)],
            ),
            compiler_params=pltpu.CompilerParams(
                dimension_semantics=("parallel",),   # shard M tiles across TCs
                vmem_limit_bytes=vmem_limit,
            ),
            cost_estimate=cost,
        )

    try:
        out2d = build(True)(x2d, w1p, b1p, w2p, b2p)
    except Exception:
        # Fallback for jax versions without BlockSpec(pipeline_mode=...) /
        # Buffered(1) support: let the resident weights double-buffer.
        out2d = build(False)(x2d, w1p, b1p, w2p, b2p)

    return out2d[:M, :embed].reshape(*lead, embed)


def mlp_reference(x, w1, b1, w2, b2):
    h = jnp.maximum(jnp.einsum("...e,eh->...h", x, w1) + b1, 0.0)
    return jnp.einsum("...h,he->...e", h, w2) + b2


if __name__ == "__main__":
    embed_size = 32
    mlp_size = 64
    batch, seq = 2, 8

    key = jax.random.PRNGKey(0)
    kx, k1, k2, k3, k4 = jax.random.split(key, 5)

    x = jax.random.normal(kx, (batch, seq, embed_size), dtype=jnp.float32)

    # Parameters stored as (in, out), i.e. transpose of PyTorch's (out, in).
    w1 = jax.random.normal(k1, (embed_size, mlp_size), dtype=jnp.float32) * 0.05
    b1 = jax.random.normal(k2, (mlp_size,), dtype=jnp.float32) * 0.05
    w2 = jax.random.normal(k3, (mlp_size, embed_size), dtype=jnp.float32) * 0.05
    b2 = jax.random.normal(k4, (embed_size,), dtype=jnp.float32) * 0.05

    ref = mlp_reference(x, w1, b1, w2, b2)

    # f32 path (exact-ish): default dtypes.
    params, meta = prepare_mlp_params(w1, b1, w2, b2)
    out = jax.block_until_ready(mlp_pallas(x, params, meta))
    assert out.shape == (batch, seq, embed_size)
    assert out.dtype == x.dtype
    assert jnp.allclose(out, ref, atol=1e-4, rtol=1e-4)

    # bf16-operand fast MXU path (f32 accumulation kept); looser tolerance.
    params_bf16, meta_bf16 = prepare_mlp_params(
        w1, b1, w2, b2, compute_dtype=jnp.bfloat16)
    out_bf16 = jax.block_until_ready(mlp_pallas(x, params_bf16, meta_bf16))
    assert jnp.allclose(out_bf16, ref, atol=3e-2, rtol=3e-2)

    print("KERNEL_OK")
</pallas_src>

<mosaic_0001>
module attributes {stable_mosaic.version = 11 : i64} {
  func.func @_mlp_kernel(%arg0: i32, %arg1: memref<8x256xf32, #tpu.memory_space<vmem>>, %arg2: memref<1x256x256xf32, #tpu.memory_space<vmem>>, %arg3: memref<1x1x256xf32, #tpu.memory_space<vmem>>, %arg4: memref<1x256x256xf32, #tpu.memory_space<vmem>>, %arg5: memref<1x256xf32, #tpu.memory_space<vmem>>, %arg6: memref<8x256xf32, #tpu.memory_space<vmem>>, %arg7: memref<8x256xf32, #tpu.memory_space<vmem>>) attributes {dimension_semantics = [#tpu.dimension_semantics<parallel>], iteration_bounds = array<i64: 2>, scalar_prefetch = 0 : i64, scratch_operands = 1 : i64, tpu.core_type = #tpu.core_type<tc>, window_params = [{transform_indices = @transform_0, window_bounds = array<i64: 8, 256>}, {pipeline_mode = #tpu.pipeline_mode<synchronous>, transform_indices = @transform_1, window_bounds = array<i64: 1, 256, 256>}, {pipeline_mode = #tpu.pipeline_mode<synchronous>, transform_indices = @transform_2, window_bounds = array<i64: 1, 1, 256>}, {pipeline_mode = #tpu.pipeline_mode<synchronous>, transform_indices = @transform_3, window_bounds = array<i64: 1, 256, 256>}, {pipeline_mode = #tpu.pipeline_mode<synchronous>, transform_indices = @transform_4, window_bounds = array<i64: 1, 256>}, {transform_indices = @transform_5, window_bounds = array<i64: 8, 256>}]} {
    %c0 = arith.constant 0 : index
    %c0_0 = arith.constant 0 : index
    %0 = vector.load %arg5[%c0, %c0_0] : memref<1x256xf32, #tpu.memory_space<vmem>>, vector<1x256xf32>
    %1 = vector.shape_cast %0 : vector<1x256xf32> to vector<1x256xf32>
    %2 = vector.broadcast %1 : vector<1x256xf32> to vector<8x256xf32>
    %c0_1 = arith.constant 0 : index
    %c0_2 = arith.constant 0 : index
    %3 = vector.load %arg7[%c0_1, %c0_2] : memref<8x256xf32, #tpu.memory_space<vmem>>, vector<8x256xf32>
    tpu.vector_store %arg7[%c0_1, %c0_2], %2 {strides = array<i32>} : memref<8x256xf32, #tpu.memory_space<vmem>>, vector<8x256xf32>,
    %c0_i32 = arith.constant 0 : i32
    %4 = arith.index_cast %c0_i32 : i32 to index
    %c0_3 = arith.constant 0 : index
    %c0_4 = arith.constant 0 : index
    %5 = vector.load %arg2[%4, %c0_3, %c0_4] : memref<1x256x256xf32, #tpu.memory_space<vmem>>, vector<1x256x256xf32>
    %6 = vector.shape_cast %5 : vector<1x256x256xf32> to vector<256x256xf32>
    %7 = arith.index_cast %c0_i32 : i32 to index
    %c0_5 = arith.constant 0 : index
    %c0_6 = arith.constant 0 : index
    %8 = vector.load %arg3[%7, %c0_5, %c0_6] : memref<1x1x256xf32, #tpu.memory_space<vmem>>, vector<1x1x256xf32>
    %9 = vector.shape_cast %8 : vector<1x1x256xf32> to vector<1x256xf32>
    %10 = arith.index_cast %c0_i32 : i32 to index
    %c0_7 = arith.constant 0 : index
    %c0_8 = arith.constant 0 : index
    %11 = vector.load %arg4[%10, %c0_7, %c0_8] : memref<1x256x256xf32, #tpu.memory_space<vmem>>, vector<1x256x256xf32>
    %12 = vector.shape_cast %11 : vector<1x256x256xf32> to vector<256x256xf32>
    %c0_9 = arith.constant 0 : index
    %c0_10 = arith.constant 0 : index
    %13 = vector.load %arg1[%c0_9, %c0_10] : memref<8x256xf32, #tpu.memory_space<vmem>>, vector<8x256xf32>
    %cst = arith.constant dense<0.000000e+00> : vector<8x256xf32>
    %14 = tpu.matmul %13, %6, %cst {dimension_numbers = #tpu.dot_dimension_numbers<[1], [0], [0], [1], [0, 0, 1, 1], [], []>} : vector<8x256xf32>, vector<256x256xf32>, vector<8x256xf32> -> vector<8x256xf32>
    %15 = vector.broadcast %9 : vector<1x256xf32> to vector<8x256xf32>
    %16 = arith.addf %14, %15 : vector<8x256xf32>
    %cst_11 = arith.constant 0.000000e+00 : f32
    %17 = vector.broadcast %cst_11 : f32 to vector<8x256xf32>
    %18 = arith.maximumf %16, %17 : vector<8x256xf32>
    %c0_12 = arith.constant 0 : index
    %c0_13 = arith.constant 0 : index
    %19 = vector.load %arg7[%c0_12, %c0_13] : memref<8x256xf32, #tpu.memory_space<vmem>>, vector<8x256xf32>
    %cst_14 = arith.constant dense<0.000000e+00> : vector<8x256xf32>
    %20 = tpu.matmul %18, %12, %cst_14 {dimension_numbers = #tpu.dot_dimension_numbers<[1], [0], [0], [1], [0, 0, 1, 1], [], []>} : vector<8x256xf32>, vector<256x256xf32>, vector<8x256xf32> -> vector<8x256xf32>
    %21 = arith.addf %19, %20 : vector<8x256xf32>
    %c0_15 = arith.constant 0 : index
    %c0_16 = arith.constant 0 : index
    %22 = vector.load %arg7[%c0_15, %c0_16] : memref<8x256xf32, #tpu.memory_space<vmem>>, vector<8x256xf32>
    tpu.vector_store %arg7[%c0_15, %c0_16], %21 {strides = array<i32>} : memref<8x256xf32, #tpu.memory_space<vmem>>, vector<8x256xf32>,
    %c1_i32 = arith.constant 1 : i32
    %c0_17 = arith.constant 0 : index
    %c0_18 = arith.constant 0 : index
    %23 = vector.load %arg7[%c0_17, %c0_18] : memref<8x256xf32, #tpu.memory_space<vmem>>, vector<8x256xf32>
    %c0_19 = arith.constant 0 : index
    %c0_20 = arith.constant 0 : index
    %24 = vector.load %arg6[%c0_19, %c0_20] : memref<8x256xf32, #tpu.memory_space<vmem>>, vector<8x256xf32>
    tpu.vector_store %arg6[%c0_19, %c0_20], %23 {strides = array<i32>} : memref<8x256xf32, #tpu.memory_space<vmem>>, vector<8x256xf32>,
    return
  }
  func.func @transform_0(%arg0: i32) -> (i32, i32) {
    %c0_i32 = arith.constant 0 : i32
    %c0_i32_0 = arith.constant 0 : i32
    return %arg0, %c0_i32 : i32, i32
  }
  func.func @transform_1(%arg0: i32) -> (i32, i32, i32) {
    %c0_i32 = arith.constant 0 : i32
    %c0_i32_0 = arith.constant 0 : i32
    %c0_i32_1 = arith.constant 0 : i32
    %c0_i32_2 = arith.constant 0 : i32
    return %c0_i32, %c0_i32_0, %c0_i32_1 : i32, i32, i32
  }
  func.func @transform_2(%arg0: i32) -> (i32, i32, i32) {
    %c0_i32 = arith.constant 0 : i32
    %c0_i32_0 = arith.constant 0 : i32
    %c0_i32_1 = arith.constant 0 : i32
    %c0_i32_2 = arith.constant 0 : i32
    return %c0_i32, %c0_i32_0, %c0_i32_1 : i32, i32, i32
  }
  func.func @transform_3(%arg0: i32) -> (i32, i32, i32) {
    %c0_i32 = arith.constant 0 : i32
    %c0_i32_0 = arith.constant 0 : i32
    %c0_i32_1 = arith.constant 0 : i32
    %c0_i32_2 = arith.constant 0 : i32
    return %c0_i32, %c0_i32_0, %c0_i32_1 : i32, i32, i32
  }
  func.func @transform_4(%arg0: i32) -> (i32, i32) {
    %c0_i32 = arith.constant 0 : i32
    %c0_i32_0 = arith.constant 0 : i32
    %c0_i32_1 = arith.constant 0 : i32
    return %c0_i32, %c0_i32_0 : i32, i32
  }
  func.func @transform_5(%arg0: i32) -> (i32, i32) {
    %c0_i32 = arith.constant 0 : i32
    %c0_i32_0 = arith.constant 0 : i32
    return %arg0, %c0_i32 : i32, i32
  }
}

module attributes {stable_mosaic.version = 11 : i64} {
  func.func @_mlp_kernel(%arg0: i32, %arg1: memref<8x256xf32, #tpu.memory_space<vmem>>, %arg2: memref<1x256x256xf32, #tpu.memory_space<vmem>>, %arg3: memref<1x1x256xf32, #tpu.memory_space<vmem>>, %arg4: memref<1x256x256xf32, #tpu.memory_space<vmem>>, %arg5: memref<1x256xf32, #tpu.memory_space<vmem>>, %arg6: memref<8x256xf32, #tpu.memory_space<vmem>>, %arg7: memref<8x256xf32, #tpu.memory_space<vmem>>) attributes {dimension_semantics = [#tpu.dimension_semantics<parallel>], iteration_bounds = array<i64: 2>, scalar_prefetch = 0 : i64, scratch_operands = 1 : i64, tpu.core_type = #tpu.core_type<tc>, window_params = [{transform_indices = @transform_0, window_bounds = array<i64: 8, 256>}, {pipeline_mode = #tpu.pipeline_mode<synchronous>, transform_indices = @transform_1, window_bounds = array<i64: 1, 256, 256>}, {pipeline_mode = #tpu.pipeline_mode<synchronous>, transform_indices = @transform_2, window_bounds = array<i64: 1, 1, 256>}, {pipeline_mode = #tpu.pipeline_mode<synchronous>, transform_indices = @transform_3, window_bounds = array<i64: 1, 256, 256>}, {pipeline_mode = #tpu.pipeline_mode<synchronous>, transform_indices = @transform_4, window_bounds = array<i64: 1, 256>}, {transform_indices = @transform_5, window_bounds = array<i64: 8, 256>}]} {
    %c0 = arith.constant 0 : index
    %c0_0 = arith.constant 0 : index
    %0 = vector.load %arg5[%c0, %c0_0] : memref<1x256xf32, #tpu.memory_space<vmem>>, vector<1x256xf32>
    %1 = vector.shape_cast %0 : vector<1x256xf32> to vector<1x256xf32>
    %2 = vector.broadcast %1 : vector<1x256xf32> to vector<8x256xf32>
    %c0_1 = arith.constant 0 : index
    %c0_2 = arith.constant 0 : index
    %3 = vector.load %arg7[%c0_1, %c0_2] : memref<8x256xf32, #tpu.memory_space<vmem>>, vector<8x256xf32>
    tpu.vector_store %arg7[%c0_1, %c0_2], %2 {strides = array<i32>} : memref<8x256xf32, #tpu.memory_space<vmem>>, vector<8x256xf32>,
    %c0_i32 = arith.constant 0 : i32
    %4 = arith.index_cast %c0_i32 : i32 to index
    %c0_3 = arith.constant 0 : index
    %c0_4 = arith.constant 0 : index
    %5 = vector.load %arg2[%4, %c0_3, %c0_4] : memref<1x256x256xf32, #tpu.memory_space<vmem>>, vector<1x256x256xf32>
    %6 = vector.shape_cast %5 : vector<1x256x256xf32> to vector<256x256xf32>
    %7 = arith.index_cast %c0_i32 : i32 to index
    %c0_5 = arith.constant 0 : index
    %c0_6 = arith.constant 0 : index
    %8 = vector.load %arg3[%7, %c0_5, %c0_6] : memref<1x1x256xf32, #tpu.memory_space<vmem>>, vector<1x1x256xf32>
    %9 = vector.shape_cast %8 : vector<1x1x256xf32> to vector<1x256xf32>
    %10 = arith.index_cast %c0_i32 : i32 to index
    %c0_7 = arith.constant 0 : index
    %c0_8 = arith.constant 0 : index
    %11 = vector.load %arg4[%10, %c0_7, %c0_8] : memref<1x256x256xf32, #tpu.memory_space<vmem>>, vector<1x256x256xf32>
    %12 = vector.shape_cast %11 : vector<1x256x256xf32> to vector<256x256xf32>
    %c0_9 = arith.constant 0 : index
    %c0_10 = arith.constant 0 : index
    %13 = vector.load %arg1[%c0_9, %c0_10] : memref<8x256xf32, #tpu.memory_space<vmem>>, vector<8x256xf32>
    %cst = arith.constant dense<0.000000e+00> : vector<8x256xf32>
    %14 = tpu.matmul %13, %6, %cst {dimension_numbers = #tpu.dot_dimension_numbers<[1], [0], [0], [1], [0, 0, 1, 1], [], []>} : vector<8x256xf32>, vector<256x256xf32>, vector<8x256xf32> -> vector<8x256xf32>
    %15 = vector.broadcast %9 : vector<1x256xf32> to vector<8x256xf32>
    %16 = arith.addf %14, %15 : vector<8x256xf32>
    %cst_11 = arith.constant 0.000000e+00 : f32
    %17 = vector.broadcast %cst_11 : f32 to vector<8x256xf32>
    %18 = arith.maximumf %16, %17 : vector<8x256xf32>
    %c0_12 = arith.constant 0 : index
    %c0_13 = arith.constant 0 : index
    %19 = vector.load %arg7[%c0_12, %c0_13] : memref<8x256xf32, #tpu.memory_space<vmem>>, vector<8x256xf32>
    %cst_14 = arith.constant dense<0.000000e+00> : vector<8x256xf32>
    %20 = tpu.matmul %18, %12, %cst_14 {dimension_numbers = #tpu.dot_dimension_numbers<[1], [0], [0], [1], [0, 0, 1, 1], [], []>} : vector<8x256xf32>, vector<256x256xf32>, vector<8x256xf32> -> vector<8x256xf32>
    %21 = arith.addf %19, %20 : vector<8x256xf32>
    %c0_15 = arith.constant 0 : index
    %c0_16 = arith.constant 0 : index
    %22 = vector.load %arg7[%c0_15, %c0_16] : memref<8x256xf32, #tpu.memory_space<vmem>>, vector<8x256xf32>
    tpu.vector_store %arg7[%c0_15, %c0_16], %21 {strides = array<i32>} : memref<8x256xf32, #tpu.memory_space<vmem>>, vector<8x256xf32>,
    %c1_i32 = arith.constant 1 : i32
    %c0_17 = arith.constant 0 : index
    %c0_18 = arith.constant 0 : index
    %23 = vector.load %arg7[%c0_17, %c0_18] : memref<8x256xf32, #tpu.memory_space<vmem>>, vector<8x256xf32>
    %c0_19 = arith.constant 0 : index
    %c0_20 = arith.constant 0 : index
    %24 = vector.load %arg6[%c0_19, %c0_20] : memref<8x256xf32, #tpu.memory_space<vmem>>, vector<8x256xf32>
    tpu.vector_store %arg6[%c0_19, %c0_20], %23 {strides = array<i32>} : memref<8x256xf32, #tpu.memory_space<vmem>>, vector<8x256xf32>,
    return
  }
  func.func @transform_0(%arg0: i32) -> (i32, i32) {
    %c0_i32 = arith.constant 0 : i32
    %c0_i32_0 = arith.constant 0 : i32
    return %arg0, %c0_i32 : i32, i32
  }
  func.func @transform_1(%arg0: i32) -> (i32, i32, i32) {
    %c0_i32 = arith.constant 0 : i32
    %c0_i32_0 = arith.constant 0 : i32
    %c0_i32_1 = arith.constant 0 : i32
    %c0_i32_2 = arith.constant 0 : i32
    return %c0_i32, %c0_i32_0, %c0_i32_1 : i32, i32, i32
  }
  func.func @transform_2(%arg0: i32) -> (i32, i32, i32) {
    %c0_i32 = arith.constant 0 : i32
    %c0_i32_0 = arith.constant 0 : i32
    %c0_i32_1 = arith.constant 0 : i32
    %c0_i32_2 = arith.constant 0 : i32
    return %c0_i32, %c0_i32_0, %c0_i32_1 : i32, i32, i32
  }
  func.func @transform_3(%arg0: i32) -> (i32, i32, i32) {
    %c0_i32 = arith.constant 0 : i32
    %c0_i32_0 = arith.constant 0 : i32
    %c0_i32_1 = arith.constant 0 : i32
    %c0_i32_2 = arith.constant 0 : i32
    return %c0_i32, %c0_i32_0, %c0_i32_1 : i32, i32, i32
  }
  func.func @transform_4(%arg0: i32) -> (i32, i32) {
    %c0_i32 = arith.constant 0 : i32
    %c0_i32_0 = arith.constant 0 : i32
    %c0_i32_1 = arith.constant 0 : i32
    return %c0_i32, %c0_i32_0 : i32, i32
  }
  func.func @transform_5(%arg0: i32) -> (i32, i32) {
    %c0_i32 = arith.constant 0 : i32
    %c0_i32_0 = arith.constant 0 : i32
    return %arg0, %c0_i32 : i32, i32
  }
}

</mosaic_0001>

<llo_original>
// kernel: tpu_custom_call.1
$region0: #{tpu_custom_call.1}
  #allocation0 [shape = 'u32[]', space=smem, size = 0x4, offset = 0x4, fixed_abs, tag = 'smem constant byte address 0x4 - core index']
  #allocation1 [shape = 'u32[144,128]{1,0:T(1,128)}', space=vmem, size = 0x12000, scoped, tag = 'internal scratch']
  #allocation2 [shape = 'f32[8,256]{1,0:T(8,128)}', space=vmem, size = 0x2000, scoped, tag = 'scratch operand']
  %s0 = inlined_call_operand.hbm [shape: f32[16,256], index: 0, kind: input, shape index: {}]
  %s1 = inlined_call_operand.hbm [shape: f32[1,256,256], index: 1, kind: input, shape index: {}]
  %s2 = inlined_call_operand.vmem [shape: f32[1,1,256], index: 2, kind: input, shape index: {}]
  %s3 = inlined_call_operand.hbm [shape: f32[1,256,256], index: 3, kind: input, shape index: {}]
  %s4 = inlined_call_operand.vmem [shape: f32[1,256], index: 4, kind: input, shape index: {}]
  %s5 = inlined_call_operand.hbm [shape: f32[16,256], index: 5, kind: output, shape index: {}]
  %s6 = sld [smem:[#allocation0]]
  $region65: #{tpu_custom_call.1} parent=0
    _
  %s8 = ssub.s32 1, %s6
  %s9 = scalar_select 0, %s8, %s6
  $region1: #{tpu_custom_call.1} parent=0
    #allocation3 [shape = 'u8[16384]{0}', space=vmem, size = 0x4000, scoped, tag = 'input window, operand 0']
    #allocation4 [shape = 's32[2]{0}', space=sflag, size = 0x8, scoped, tag = 'scoped memory for tpu_custom_call.1']
    #allocation5 [shape = 's32[2]{0}', space=sflag, size = 0x8, scoped, tag = 'scoped memory for tpu_custom_call.1']
    #allocation6 [shape = 'u8[262144]{0}', space=vmem, size = 0x40000, scoped, tag = 'input window, operand 1, single buffered']
    #allocation7 [shape = 's32[1]{0}', space=sflag, size = 0x4, scoped, tag = 'scoped memory for tpu_custom_call.1']
    #allocation8 [shape = 'u8[262144]{0}', space=vmem, size = 0x40000, scoped, tag = 'input window, operand 3, single buffered']
    #allocation9 [shape = 'u8[16384]{0}', space=vmem, size = 0x4000, scoped, tag = 'output window, operand 0']
    %10 = vsyncpa [#allocation4], 0
    %s11 = scalar_lea.sflag [#allocation4], 1
    %12 = vsyncpa %s11, 0
    %13 = vsyncpa [#allocation7], 0
    %14 = vsyncpa [#allocation5], 0
    %s15 = scalar_lea.sflag [#allocation5], 1
    %16 = vsyncpa %s15, 0
    loop: start=0, step=1, limit=4
    $region2: #{tpu_custom_call.1} parent=1 // loop_pre_header
      _
    $region3: #{tpu_custom_call.1} parent=1 // loop_header
      %s18 = sphi 0, %s22
      %p19 = scmp.ge.s32.totalorder %s18, 4
      %s28 = sphi 0, %s30
      %s31 = sphi 0, %s28
      %s32 = sphi 0, %s31
      %s48 = sphi 0, %s32
      %s52 = sphi 0, %s52
      %s54 = sphi 0, %s52
      %s55 = sphi 0, %s54
      %s69 = sphi 0, %s55
      %s73 = sphi 0, %s73
      %s75 = sphi 0, %s73
      %s76 = sphi 0, %s75
      %s90 = sphi 0, %s76
      %s94 = sphi 0, %s94
      %s96 = sphi 0, %s94
      %s97 = sphi 0, %s96
      %s111 = sphi 0, %s97
      %s115 = sphi 0, %s115
      %s117 = sphi 0, %s115
      %s118 = sphi 0, %s117
      %s132 = sphi 0, %s118
      %s138 = sphi 0, %s140
      %s141 = sphi 0, %s138
      %s142 = sphi 0, %s141
      %s158 = sphi 0, %s142
    $region4: #{tpu_custom_call.1} parent=1 // loop_header_branch
      %21 = sbr.rel (%p19) target = $region8
    $region5: #{tpu_custom_call.1} parent=1 // loop_body
      %s23 = ssub.s32 %s18, 1
      %s24 = ssub.s32 %s18, 2
      %s25 = sadd.s32 %s18, 1
      %s26 = ssub.s32 %s18, %s25
      %p27 = scmp.eq.s32.totalorder %s26, 0
      %s29 = sadd.s32 %s28, 1
      %s30 = scalar_select %p27, %s28, %s29
      %p33 = pneg %p27
      %p34 = scmp.eq.s32.totalorder %s18, 1
      %p35 = por %p33, %p34
      %p36 = scmp.ne.s32.totalorder %s28, %s31
      %p37 = scmp.eq.s32.totalorder %s18, 0
      %p38 = por %p36, %p37
      %p39 = scmp.ne.s32.totalorder %s28, %s31
      %p40 = scmp.eq.s32.totalorder %s23, 1
      %p41 = por %p39, %p40
      %p42 = scmp.ne.s32.totalorder %s31, %s32
      %p43 = scmp.eq.s32.totalorder %s23, 0
      %p44 = por %p42, %p43
      %p45 = scmp.ne.s32.totalorder %s31, %s32
      %p46 = scmp.eq.s32.totalorder %s24, 1
      %p47 = por %p45, %p46
      %p49 = scmp.ne.s32.totalorder %s32, %s48
      %p50 = scmp.eq.s32.totalorder %s24, 0
      %p51 = por %p49, %p50
      %s53 = sadd.s32 %s52, 1
      %p56 = scmp.eq.s32.totalorder %s18, 1
      %p57 = scmp.ne.s32.totalorder %s52, %s54
      %p58 = scmp.eq.s32.totalorder %s18, 0
      %p59 = por %p57, %p58
      %p60 = scmp.ne.s32.totalorder %s52, %s54
      %p61 = scmp.eq.s32.totalorder %s23, 1
      %p62 = por %p60, %p61
      %p63 = scmp.ne.s32.totalorder %s54, %s55
      %p64 = scmp.eq.s32.totalorder %s23, 0
      %p65 = por %p63, %p64
      %p66 = scmp.ne.s32.totalorder %s54, %s55
      %p67 = scmp.eq.s32.totalorder %s24, 1
      %p68 = por %p66, %p67
      %p70 = scmp.ne.s32.totalorder %s55, %s69
      %p71 = scmp.eq.s32.totalorder %s24, 0
      %p72 = por %p70, %p71
      %s74 = sadd.s32 %s73, 1
      %p77 = scmp.eq.s32.totalorder %s18, 1
      %p78 = scmp.ne.s32.totalorder %s73, %s75
      %p79 = scmp.eq.s32.totalorder %s18, 0
      %p80 = por %p78, %p79
      %p81 = scmp.ne.s32.totalorder %s73, %s75
      %p82 = scmp.eq.s32.totalorder %s23, 1
      %p83 = por %p81, %p82
      %p84 = scmp.ne.s32.totalorder %s75, %s76
      %p85 = scmp.eq.s32.totalorder %s23, 0
      %p86 = por %p84, %p85
      %p87 = scmp.ne.s32.totalorder %s75, %s76
      %p88 = scmp.eq.s32.totalorder %s24, 1
      %p89 = por %p87, %p88
      %p91 = scmp.ne.s32.totalorder %s76, %s90
      %p92 = scmp.eq.s32.totalorder %s24, 0
      %p93 = por %p91, %p92
      %s95 = sadd.s32 %s94, 1
      %p98 = scmp.eq.s32.totalorder %s18, 1
      %p99 = scmp.ne.s32.totalorder %s94, %s96
      %p100 = scmp.eq.s32.totalorder %s18, 0
      %p101 = por %p99, %p100
      %p102 = scmp.ne.s32.totalorder %s94, %s96
      %p103 = scmp.eq.s32.totalorder %s23, 1
      %p104 = por %p102, %p103
      %p105 = scmp.ne.s32.totalorder %s96, %s97
      %p106 = scmp.eq.s32.totalorder %s23, 0
      %p107 = por %p105, %p106
      %p108 = scmp.ne.s32.totalorder %s96, %s97
      %p109 = scmp.eq.s32.totalorder %s24, 1
      %p110 = por %p108, %p109
      %p112 = scmp.ne.s32.totalorder %s97, %s111
      %p113 = scmp.eq.s32.totalorder %s24, 0
      %p114 = por %p112, %p113
      %s116 = sadd.s32 %s115, 1
      %p119 = scmp.eq.s32.totalorder %s18, 1
      %p120 = scmp.ne.s32.totalorder %s115, %s117
      %p121 = scmp.eq.s32.totalorder %s18, 0
      %p122 = por %p120, %p121
      %p123 = scmp.ne.s32.totalorder %s115, %s117
      %p124 = scmp.eq.s32.totalorder %s23, 1
      %p125 = por %p123, %p124
      %p126 = scmp.ne.s32.totalorder %s117, %s118
      %p127 = scmp.eq.s32.totalorder %s23, 0
      %p128 = por %p126, %p127
      %p129 = scmp.ne.s32.totalorder %s117, %s118
      %p130 = scmp.eq.s32.totalorder %s24, 1
      %p131 = por %p129, %p130
      %p133 = scmp.ne.s32.totalorder %s118, %s132
      %p134 = scmp.eq.s32.totalorder %s24, 0
      %p135 = por %p133, %p134
      %s136 = ssub.s32 %s18, %s25
      %p137 = scmp.eq.s32.totalorder %s136, 0
      %s139 = sadd.s32 %s138, 1
      %s140 = scalar_select %p137, %s138, %s139
      %p143 = pneg %p137
      %p144 = scmp.eq.s32.totalorder %s18, 1
      %p145 = por %p143, %p144
      %p146 = scmp.ne.s32.totalorder %s138, %s141
      %p147 = scmp.eq.s32.totalorder %s18, 0
      %p148 = por %p146, %p147
      %p149 = scmp.ne.s32.totalorder %s138, %s141
      %p150 = scmp.eq.s32.totalorder %s23, 1
      %p151 = por %p149, %p150
      %p152 = scmp.ne.s32.totalorder %s141, %s142
      %p153 = scmp.eq.s32.totalorder %s23, 0
      %p154 = por %p152, %p153
      %p155 = scmp.ne.s32.totalorder %s141, %s142
      %p156 = scmp.eq.s32.totalorder %s24, 1
      %p157 = por %p155, %p156
      %p159 = scmp.ne.s32.totalorder %s142, %s158
      %p160 = scmp.eq.s32.totalorder %s24, 0
      %p161 = por %p159, %p160
      %p162 = scmp.le.s32.totalorder 1, %s18
      %p163 = scmp.lt.s32.totalorder %s18, 3
      %p164 = pnand %p162, %p163
      %p165 = pneg %p164
      // Predicated region
      $region9: #{tpu_custom_call.1} parent=5 // pred_check
        _
      $region10: #{tpu_custom_call.1} parent=5 // pred_check_branch
        %167 = sbr.rel (%p164) target = $region12
      $region11: #{tpu_custom_call.1} parent=5 // pred_region
        %s168 = ssub.s32 %s18, 1
        // Predicated region
        $region13: #{tpu_custom_call.1} parent=11 // pred_check
          %p169 = pneg %p65
        $region14: #{tpu_custom_call.1} parent=11 // pred_check_branch
          %171 = sbr.rel (%p169) target = $region16
        $region15: #{tpu_custom_call.1} parent=11 // pred_region
          %s173 = ssub.s32 8192, 8192
          %174 = vsyncadd [#allocation7], %s173
          %s175 = sshll.u32 [#allocation6], 4
          %s176 = int_to_ptr.vmem [resolvable:$true] %s175
          %181 = dma.hbm_to_vmem [thread:$0]  %s1, 8192, %s176, [#allocation7], 256, 256, 16
        $region16: #{tpu_custom_call.1} parent=11 // pred_fallthru
          _
        // Predicated region
        $region17: #{tpu_custom_call.1} parent=11 // pred_check
          %p182 = pneg %p86
        $region18: #{tpu_custom_call.1} parent=11 // pred_check_branch
          %184 = sbr.rel (%p182) target = $region20
        $region19: #{tpu_custom_call.1} parent=11 // pred_region
          _
        $region20: #{tpu_custom_call.1} parent=11 // pred_fallthru
          _
        // Predicated region
        $region21: #{tpu_custom_call.1} parent=11 // pred_check
          %p185 = pneg %p107
        $region22: #{tpu_custom_call.1} parent=11 // pred_check_branch
          %187 = sbr.rel (%p185) target = $region24
        $region23: #{tpu_custom_call.1} parent=11 // pred_region
          %s189 = ssub.s32 8192, 8192
          %190 = vsyncadd [#allocation7], %s189
          %s191 = sshll.u32 [#allocation8], 4
          %s192 = int_to_ptr.vmem [resolvable:$true] %s191
          %197 = dma.hbm_to_vmem [thread:$0]  %s3, 8192, %s192, [#allocation7], 256, 256, 16
        $region24: #{tpu_custom_call.1} parent=11 // pred_fallthru
          _
        // Predicated region
        $region25: #{tpu_custom_call.1} parent=11 // pred_check
          %p198 = pneg %p128
        $region26: #{tpu_custom_call.1} parent=11 // pred_check_branch
          %200 = sbr.rel (%p198) target = $region28
        $region27: #{tpu_custom_call.1} parent=11 // pred_region
          _
        $region28: #{tpu_custom_call.1} parent=11 // pred_fallthru
          _
      $region12: #{tpu_custom_call.1} parent=5 // pred_fallthru
        _
      %p201 = scmp.lt.s32.totalorder %s18, 2
      // Predicated region
      $region29: #{tpu_custom_call.1} parent=5 // pred_check
        %p202 = pneg %p201
      $region30: #{tpu_custom_call.1} parent=5 // pred_check_branch
        %204 = sbr.rel (%p202) target = $region32
      $region31: #{tpu_custom_call.1} parent=5 // pred_region
        // Predicated region
        $region33: #{tpu_custom_call.1} parent=31 // pred_check
          %p205 = pneg %p38
        $region34: #{tpu_custom_call.1} parent=31 // pred_check_branch
          %207 = sbr.rel (%p205) target = $region36
        $region35: #{tpu_custom_call.1} parent=31 // pred_region
          %s208 = sand.u32 %s28, 1
          %s209 = scalar_lea.sflag [#allocation4], %s208
          %s210 = sand.u32 %s28, 1
          %s211 = smul.addr %s210, 16
          %s212 = scalar_lea.vmem [#allocation3], %s211
          %s214 = ssub.s32 256, 256
          %215 = vsyncadd %s209, %s214
          %s216 = smul.addr %s18, 2
          %s217 = smul.addr %s216, 128
          %s218 = scalar_lea.hbm %s0, %s217
          %s220 = sshll.u32 %s212, 4
          %s221 = int_to_ptr.vmem [resolvable:$true] %s220
          %223 = dma.hbm_to_vmem [thread:$0]  %s218, 256, %s221, %s209
        $region36: #{tpu_custom_call.1} parent=31 // pred_fallthru
          _
      $region32: #{tpu_custom_call.1} parent=5 // pred_fallthru
        _
      %p224 = scmp.le.s32.totalorder 1, %s18
      %p225 = scmp.lt.s32.totalorder %s18, 3
      %p226 = pnand %p224, %p225
      %p227 = pneg %p226
      // Predicated region
      $region37: #{tpu_custom_call.1} parent=5 // pred_check
        _
      $region38: #{tpu_custom_call.1} parent=5 // pred_check_branch
        %229 = sbr.rel (%p226) target = $region40
      $region39: #{tpu_custom_call.1} parent=5 // pred_region
        %s230 = ssub.s32 %s18, 1
        %s231 = sand.u32 %s31, 1
        %s232 = scalar_lea.sflag [#allocation4], %s231
        %s233 = sand.u32 %s31, 1
        %s234 = smul.addr %s233, 16
        %s235 = scalar_lea.vmem [#allocation3], %s234
        // Predicated region
        $region41: #{tpu_custom_call.1} parent=39 // pred_check
          %p236 = pneg %p44
        $region42: #{tpu_custom_call.1} parent=39 // pred_check_branch
          %238 = sbr.rel (%p236) target = $region44
        $region43: #{tpu_custom_call.1} parent=39 // pred_region
          %239 = dma.done %s232, 256
        $region44: #{tpu_custom_call.1} parent=39 // pred_fallthru
          _
        // Predicated region
        $region45: #{tpu_custom_call.1} parent=39 // pred_check
          %p240 = pneg %p65
        $region46: #{tpu_custom_call.1} parent=39 // pred_check_branch
          %242 = sbr.rel (%p240) target = $region48
        $region47: #{tpu_custom_call.1} parent=39 // pred_region
          %243 = dma.done [#allocation7], 8192
        $region48: #{tpu_custom_call.1} parent=39 // pred_fallthru
          _
        // Predicated region
        $region49: #{tpu_custom_call.1} parent=39 // pred_check
          %p244 = pneg %p107
        $region50: #{tpu_custom_call.1} parent=39 // pred_check_branch
          %246 = sbr.rel (%p244) target = $region52
        $region51: #{tpu_custom_call.1} parent=39 // pred_region
          %247 = dma.done [#allocation7], 8192
        $region52: #{tpu_custom_call.1} parent=39 // pred_fallthru
          _
        %s248 = sand.u32 %s31, 1
        %s249 = scalar_lea.sflag [#allocation4], %s248
        %s250 = sand.u32 %s31, 1
        %s251 = smul.addr %s250, 16
        %s252 = scalar_lea.vmem [#allocation3], %s251
        %p253 = pneg %p44
        %p254 = pneg %p41
        %p255 = pneg %p65
        %p256 = pneg %p62
        %p257 = pneg %p86
        %p258 = pneg %p83
        %p259 = pneg %p107
        %p260 = pneg %p104
        %p261 = pneg %p128
        %p262 = pneg %p125
        %p263 = pneg %p154
        %p264 = pneg %p151
        %s265 = sand.u32 %s141, 1
        %s266 = scalar_lea.sflag [#allocation5], %s265
        %s267 = sand.u32 %s141, 1
        %s268 = smul.addr %s267, 16
        %s269 = scalar_lea.vmem [#allocation9], %s268
        %v270 = vld [vmem:[%s4] sm:$0x3]
        %v272 = vlaneseq
        %v273 = vshrl.u32 %v272, 7
        %v274 = vsub.s32 0, %v273
        %v275 = vrot.slane %v270, %v274
        %v276 = vlaneseq
        %v277 = vshrl.u32 %v276, 7
        %v278 = vsub.s32 1, %v277
        %v279 = vrot.slane %v270, %v278
        %282 = vst [vmem:[#allocation2] sm:$0xff] %v275
        %283 = vst [vmem:[#allocation2 + $0x8] sm:$0xff] %v279
        %v284 = vld [vmem:[#allocation6] sm:$0xff]
        %v285 = vld [vmem:[#allocation6 + $0x8] sm:$0xff]
        %v286 = vld [vmem:[#allocation6 + $0x10] sm:$0xff]
        %v287 = vld [vmem:[#allocation6 + $0x18] sm:$0xff]
        %v288 = vld [vmem:[#allocation6 + $0x20] sm:$0xff]
        %v289 = vld [vmem:[#allocation6 + $0x28] sm:$0xff]
        %v290 = vld [vmem:[#allocation6 + $0x30] sm:$0xff]
        %v291 = vld [vmem:[#allocation6 + $0x38] sm:$0xff]
        %v292 = vld [vmem:[#allocation6 + $0x40] sm:$0xff]
        %v293 = vld [vmem:[#allocation6 + $0x48] sm:$0xff]
        %v294 = vld [vmem:[#allocation6 + $0x50] sm:$0xff]
        %v295 = vld [vmem:[#allocation6 + $0x58] sm:$0xff]
        %v296 = vld [vmem:[#allocation6 + $0x60] sm:$0xff]
        %v297 = vld [vmem:[#allocation6 + $0x68] sm:$0xff]
        %v298 = vld [vmem:[#allocation6 + $0x70] sm:$0xff]
        %v299 = vld [vmem:[#allocation6 + $0x78] sm:$0xff]
        %v300 = vld [vmem:[#allocation6 + $0x80] sm:$0xff]
        %v301 = vld [vmem:[#allocation6 + $0x88] sm:$0xff]
        %v302 = vld [vmem:[#allocation6 + $0x90] sm:$0xff]
        %v303 = vld [vmem:[#allocation6 + $0x98] sm:$0xff]
        %v304 = vld [vmem:[#allocation6 + $0xa0] sm:$0xff]
        %v305 = vld [vmem:[#allocation6 + $0xa8] sm:$0xff]
        %v306 = vld [vmem:[#allocation6 + $0xb0] sm:$0xff]
        %v307 = vld [vmem:[#allocation6 + $0xb8] sm:$0xff]
        %v308 = vld [vmem:[#allocation6 + $0xc0] sm:$0xff]
        %v309 = vld [vmem:[#allocation6 + $0xc8] sm:$0xff]
        %v310 = vld [vmem:[#allocation6 + $0xd0] sm:$0xff]
        %v311 = vld [vmem:[#allocation6 + $0xd8] sm:$0xff]
        %v312 = vld [vmem:[#allocation6 + $0xe0] sm:$0xff]
        %v313 = vld [vmem:[#allocation6 + $0xe8] sm:$0xff]
        %v314 = vld [vmem:[#allocation6 + $0xf0] sm:$0xff]
        %v315 = vld [vmem:[#allocation6 + $0xf8] sm:$0xff]
        %v316 = vld [vmem:[#allocation6 + $0x100] sm:$0xff]
        %v317 = vld [vmem:[#allocation6 + $0x108] sm:$0xff]
        %v318 = vld [vmem:[#allocation6 + $0x110] sm:$0xff]
        %v319 = vld [vmem:[#allocation6 + $0x118] sm:$0xff]
        %v320 = vld [vmem:[#allocation6 + $0x120] sm:$0xff]
        %v321 = vld [vmem:[#allocation6 + $0x128] sm:$0xff]
        %v322 = vld [vmem:[#allocation6 + $0x130] sm:$0xff]
        %v323 = vld [vmem:[#allocation6 + $0x138] sm:$0xff]
        %v324 = vld [vmem:[#allocation6 + $0x140] sm:$0xff]
        %v325 = vld [vmem:[#allocation6 + $0x148] sm:$0xff]
        %v326 = vld [vmem:[#allocation6 + $0x150] sm:$0xff]
        %v327 = vld [vmem:[#allocation6 + $0x158] sm:$0xff]
        %v328 = vld [vmem:[#allocation6 + $0x160] sm:$0xff]
        %v329 = vld [vmem:[#allocation6 + $0x168] sm:$0xff]
        %v330 = vld [vmem:[#allocation6 + $0x170] sm:$0xff]
        %v331 = vld [vmem:[#allocation6 + $0x178] sm:$0xff]
        %v332 = vld [vmem:[#allocation6 + $0x180] sm:$0xff]
        %v333 = vld [vmem:[#allocation6 + $0x188] sm:$0xff]
        %v334 = vld [vmem:[#allocation6 + $0x190] sm:$0xff]
        %v335 = vld [vmem:[#allocation6 + $0x198] sm:$0xff]
        %v336 = vld [vmem:[#allocation6 + $0x1a0] sm:$0xff]
        %v337 = vld [vmem:[#allocation6 + $0x1a8] sm:$0xff]
        %v338 = vld [vmem:[#allocation6 + $0x1b0] sm:$0xff]
        %v339 = vld [vmem:[#allocation6 + $0x1b8] sm:$0xff]
        %v340 = vld [vmem:[#allocation6 + $0x1c0] sm:$0xff]
        %v341 = vld [vmem:[#allocation6 + $0x1c8] sm:$0xff]
        %v342 = vld [vmem:[#allocation6 + $0x1d0] sm:$0xff]
        %v343 = vld [vmem:[#allocation6 + $0x1d8] sm:$0xff]
        %v344 = vld [vmem:[#allocation6 + $0x1e0] sm:$0xff]
        %v345 = vld [vmem:[#allocation6 + $0x1e8] sm:$0xff]
        %v346 = vld [vmem:[#allocation6 + $0x1f0] sm:$0xff]
        %v347 = vld [vmem:[#allocation6 + $0x1f8] sm:$0xff]
        %v348 = vld [vmem:[%s2] sm:$0x3]
        %v349 = vld [vmem:[#allocation8] sm:$0xff]
        %v350 = vld [vmem:[#allocation8 + $0x8] sm:$0xff]
        %v351 = vld [vmem:[#allocation8 + $0x10] sm:$0xff]
        %v352 = vld [vmem:[#allocation8 + $0x18] sm:$0xff]
        %v353 = vld [vmem:[#allocation8 + $0x20] sm:$0xff]
        %v354 = vld [vmem:[#allocation8 + $0x28] sm:$0xff]
        %v355 = vld [vmem:[#allocation8 + $0x30] sm:$0xff]
        %v356 = vld [vmem:[#allocation8 + $0x38] sm:$0xff]
        %v357 = vld [vmem:[#allocation8 + $0x40] sm:$0xff]
        %v358 = vld [vmem:[#allocation8 + $0x48] sm:$0xff]
        %v359 = vld [vmem:[#allocation8 + $0x50] sm:$0xff]
        %v360 = vld [vmem:[#allocation8 + $0x58] sm:$0xff]
        %v361 = vld [vmem:[#allocation8 + $0x60] sm:$0xff]
        %v362 = vld [vmem:[#allocation8 + $0x68] sm:$0xff]
        %v363 = vld [vmem:[#allocation8 + $0x70] sm:$0xff]
        %v364 = vld [vmem:[#allocation8 + $0x78] sm:$0xff]
        %v365 = vld [vmem:[#allocation8 + $0x80] sm:$0xff]
        %v366 = vld [vmem:[#allocation8 + $0x88] sm:$0xff]
        %v367 = vld [vmem:[#allocation8 + $0x90] sm:$0xff]
        %v368 = vld [vmem:[#allocation8 + $0x98] sm:$0xff]
        %v369 = vld [vmem:[#allocation8 + $0xa0] sm:$0xff]
        %v370 = vld [vmem:[#allocation8 + $0xa8] sm:$0xff]
        %v371 = vld [vmem:[#allocation8 + $0xb0] sm:$0xff]
        %v372 = vld [vmem:[#allocation8 + $0xb8] sm:$0xff]
        %v373 = vld [vmem:[#allocation8 + $0xc0] sm:$0xff]
        %v374 = vld [vmem:[#allocation8 + $0xc8] sm:$0xff]
        %v375 = vld [vmem:[#allocation8 + $0xd0] sm:$0xff]
        %v376 = vld [vmem:[#allocation8 + $0xd8] sm:$0xff]
        %v377 = vld [vmem:[#allocation8 + $0xe0] sm:$0xff]
        %v378 = vld [vmem:[#allocation8 + $0xe8] sm:$0xff]
        %v379 = vld [vmem:[#allocation8 + $0xf0] sm:$0xff]
        %v380 = vld [vmem:[#allocation8 + $0xf8] sm:$0xff]
        %v381 = vld [vmem:[#allocation8 + $0x100] sm:$0xff]
        %v382 = vld [vmem:[#allocation8 + $0x108] sm:$0xff]
        %v383 = vld [vmem:[#allocation8 + $0x110] sm:$0xff]
        %v384 = vld [vmem:[#allocation8 + $0x118] sm:$0xff]
        %v385 = vld [vmem:[#allocation8 + $0x120] sm:$0xff]
        %v386 = vld [vmem:[#allocation8 + $0x128] sm:$0xff]
        %v387 = vld [vmem:[#allocation8 + $0x130] sm:$0xff]
        %v388 = vld [vmem:[#allocation8 + $0x138] sm:$0xff]
        %v389 = vld [vmem:[#allocation8 + $0x140] sm:$0xff]
        %v390 = vld [vmem:[#allocation8 + $0x148] sm:$0xff]
        %v391 = vld [vmem:[#allocation8 + $0x150] sm:$0xff]
        %v392 = vld [vmem:[#allocation8 + $0x158] sm:$0xff]
        %v393 = vld [vmem:[#allocation8 + $0x160] sm:$0xff]
        %v394 = vld [vmem:[#allocation8 + $0x168] sm:$0xff]
        %v395 = vld [vmem:[#allocation8 + $0x170] sm:$0xff]
        %v396 = vld [vmem:[#allocation8 + $0x178] sm:$0xff]
        %v397 = vld [vmem:[#allocation8 + $0x180] sm:$0xff]
        %v398 = vld [vmem:[#allocation8 + $0x188] sm:$0xff]
        %v399 = vld [vmem:[#allocation8 + $0x190] sm:$0xff]
        %v400 = vld [vmem:[#allocation8 + $0x198] sm:$0xff]
        %v401 = vld [vmem:[#allocation8 + $0x1a0] sm:$0xff]
        %v402 = vld [vmem:[#allocation8 + $0x1a8] sm:$0xff]
        %v403 = vld [vmem:[#allocation8 + $0x1b0] sm:$0xff]
        %v404 = vld [vmem:[#allocation8 + $0x1b8] sm:$0xff]
        %v405 = vld [vmem:[#allocation8 + $0x1c0] sm:$0xff]
        %v406 = vld [vmem:[#allocation8 + $0x1c8] sm:$0xff]
        %v407 = vld [vmem:[#allocation8 + $0x1d0] sm:$0xff]
        %v408 = vld [vmem:[#allocation8 + $0x1d8] sm:$0xff]
        %v409 = vld [vmem:[#allocation8 + $0x1e0] sm:$0xff]
        %v410 = vld [vmem:[#allocation8 + $0x1e8] sm:$0xff]
        %v411 = vld [vmem:[#allocation8 + $0x1f0] sm:$0xff]
        %v412 = vld [vmem:[#allocation8 + $0x1f8] sm:$0xff]
        %v413 = vld [vmem:[%s235] sm:$0xff]
        %v414 = vld [vmem:[%s235 + $0x8] sm:$0xff]
        %v416 = vlaneseq
        %v417 = vshrl.u32 %v416, 7
        %v418 = vsub.s32 0, %v417
        %v419 = vrot.slane %v348, %v418
        %v420 = vlaneseq
        %v421 = vshrl.u32 %v420, 7
        %v422 = vsub.s32 1, %v421
        %v423 = vrot.slane %v348, %v422
        %426 = vmatprep.subr.mxu0 %v315
        %427 = vmatpush1.msra.mxu0 %v314
        %428 = vmatprep.subr.mxu0 %v313
        %429 = vmatpush1.msra.mxu0 %v312
        %430 = vmatprep.subr.mxu0 %v311
        %431 = vmatpush1.msra.mxu0 %v310
        %432 = vmatprep.subr.mxu0 %v309
        %433 = vmatpush1.msra.mxu0 %v308
        %434 = vmatprep.subr.mxu0 %v307
        %435 = vmatpush1.msra.mxu0 %v306
        %436 = vmatprep.subr.mxu0 %v305
        %437 = vmatpush1.msra.mxu0 %v304
        %438 = vmatprep.subr.mxu0 %v303
        %439 = vmatpush1.msra.mxu0 %v302
        %440 = vmatprep.subr.mxu0 %v301
        %441 = vmatpush1.msra.mxu0 %v300
        %442 = vmatprep.subr.mxu0 %v299
        %443 = vmatpush1.msra.mxu0 %v298
        %444 = vmatprep.subr.mxu0 %v297
        %445 = vmatpush1.msra.mxu0 %v296
        %446 = vmatprep.subr.mxu0 %v295
        %447 = vmatpush1.msra.mxu0 %v294
        %448 = vmatprep.subr.mxu0 %v293
        %449 = vmatpush1.msra.mxu0 %v292
        %450 = vmatprep.subr.mxu0 %v291
        %451 = vmatpush1.msra.mxu0 %v290
        %452 = vmatprep.subr.mxu0 %v289
        %453 = vmatpush1.msra.mxu0 %v288
        %454 = vmatprep.subr.mxu0 %v287
        %455 = vmatpush1.msra.mxu0 %v286
        %456 = vmatprep.subr.mxu0 %v285
        %457 = vmatpush1.msra.mxu0 %v284
        %458 = vmatprep.subr.mxu0 %v347
        %459 = vmatpush2.msra.mxu0 %v346
        %460 = vmatprep.subr.mxu0 %v345
        %461 = vmatpush2.msra.mxu0 %v344
        %462 = vmatprep.subr.mxu0 %v343
        %463 = vmatpush2.msra.mxu0 %v342
        %464 = vmatprep.subr.mxu0 %v341
        %465 = vmatpush2.msra.mxu0 %v340
        %466 = vmatprep.subr.mxu0 %v339
        %467 = vmatpush2.msra.mxu0 %v338
        %468 = vmatprep.subr.mxu0 %v337
        %469 = vmatpush2.msra.mxu0 %v336
        %470 = vmatprep.subr.mxu0 %v335
        %471 = vmatpush2.msra.mxu0 %v334
        %472 = vmatprep.subr.mxu0 %v333
        %473 = vmatpush2.msra.mxu0 %v332
        %474 = vmatprep.subr.mxu0 %v331
        %475 = vmatpush2.msra.mxu0 %v330
        %476 = vmatprep.subr.mxu0 %v329
        %477 = vmatpush2.msra.mxu0 %v328
        %478 = vmatprep.subr.mxu0 %v327
        %479 = vmatpush2.msra.mxu0 %v326
        %480 = vmatprep.subr.mxu0 %v325
        %481 = vmatpush2.msra.mxu0 %v324
        %482 = vmatprep.subr.mxu0 %v323
        %483 = vmatpush2.msra.mxu0 %v322
        %484 = vmatprep.subr.mxu0 %v321
        %485 = vmatpush2.msra.mxu0 %v320
        %486 = vmatprep.subr.mxu0 %v319
        %487 = vmatpush2.msra.mxu0 %v318
        %488 = vmatprep.subr.mxu0 %v317
        %489 = vmatpush2.msra.mxu0 %v316
        %490 = vmatprep.mubr.f32.mxu0 %v414
        %491 = vmatmul.mubr.f32.gmra.mxu0 %v413
        %v492 = vpop.f32.mrf.mxu0
        %v493 = vadd.f32 %v419, %v492
        %v494 = vpop.f32.mrf.mxu0
        %v495 = vadd.f32 %v423, %v494
        %496 = vdwg.mxu0
        %v497 = vmax.f32 %v493, 0.0
        %v498 = vmax.f32 %v495, 0.0
        %v499 = vld [vmem:[#allocation2] sm:$0xff]
        %v500 = vld [vmem:[#allocation2 + $0x8] sm:$0xff]
        %501 = vmatprep.subr.mxu0 %v380
        %502 = vmatpush1.msra.mxu0 %v379
        %503 = vmatprep.subr.mxu0 %v378
        %504 = vmatpush1.msra.mxu0 %v377
        %505 = vmatprep.subr.mxu0 %v376
        %506 = vmatpush1.msra.mxu0 %v375
        %507 = vmatprep.subr.mxu0 %v374
        %508 = vmatpush1.msra.mxu0 %v373
        %509 = vmatprep.subr.mxu0 %v372
        %510 = vmatpush1.msra.mxu0 %v371
        %511 = vmatprep.subr.mxu0 %v370
        %512 = vmatpush1.msra.mxu0 %v369
        %513 = vmatprep.subr.mxu0 %v368
        %514 = vmatpush1.msra.mxu0 %v367
        %515 = vmatprep.subr.mxu0 %v366
        %516 = vmatpush1.msra.mxu0 %v365
        %517 = vmatprep.subr.mxu0 %v364
        %518 = vmatpush1.msra.mxu0 %v363
        %519 = vmatprep.subr.mxu0 %v362
        %520 = vmatpush1.msra.mxu0 %v361
        %521 = vmatprep.subr.mxu0 %v360
        %522 = vmatpush1.msra.mxu0 %v359
        %523 = vmatprep.subr.mxu0 %v358
        %524 = vmatpush1.msra.mxu0 %v357
        %525 = vmatprep.subr.mxu0 %v356
        %526 = vmatpush1.msra.mxu0 %v355
        %527 = vmatprep.subr.mxu0 %v354
        %528 = vmatpush1.msra.mxu0 %v353
        %529 = vmatprep.subr.mxu0 %v352
        %530 = vmatpush1.msra.mxu0 %v351
        %531 = vmatprep.subr.mxu0 %v350
        %532 = vmatpush1.msra.mxu0 %v349
        %533 = vmatprep.subr.mxu0 %v412
        %534 = vmatpush2.msra.mxu0 %v411
        %535 = vmatprep.subr.mxu0 %v410
        %536 = vmatpush2.msra.mxu0 %v409
        %537 = vmatprep.subr.mxu0 %v408
        %538 = vmatpush2.msra.mxu0 %v407
        %539 = vmatprep.subr.mxu0 %v406
        %540 = vmatpush2.msra.mxu0 %v405
        %541 = vmatprep.subr.mxu0 %v404
        %542 = vmatpush2.msra.mxu0 %v403
        %543 = vmatprep.subr.mxu0 %v402
        %544 = vmatpush2.msra.mxu0 %v401
        %545 = vmatprep.subr.mxu0 %v400
        %546 = vmatpush2.msra.mxu0 %v399
        %547 = vmatprep.subr.mxu0 %v398
        %548 = vmatpush2.msra.mxu0 %v397
        %549 = vmatprep.subr.mxu0 %v396
        %550 = vmatpush2.msra.mxu0 %v395
        %551 = vmatprep.subr.mxu0 %v394
        %552 = vmatpush2.msra.mxu0 %v393
        %553 = vmatprep.subr.mxu0 %v392
        %554 = vmatpush2.msra.mxu0 %v391
        %555 = vmatprep.subr.mxu0 %v390
        %556 = vmatpush2.msra.mxu0 %v389
        %557 = vmatprep.subr.mxu0 %v388
        %558 = vmatpush2.msra.mxu0 %v387
        %559 = vmatprep.subr.mxu0 %v386
        %560 = vmatpush2.msra.mxu0 %v385
        %561 = vmatprep.subr.mxu0 %v384
        %562 = vmatpush2.msra.mxu0 %v383
        %563 = vmatprep.subr.mxu0 %v382
        %564 = vmatpush2.msra.mxu0 %v381
        %565 = vmatprep.mubr.f32.mxu0 %v498
        %566 = vmatmul.mubr.f32.gmra.mxu0 %v497
        %v567 = vpop.f32.mrf.mxu0
        %v568 = vadd.f32 0.0, %v567
        %v569 = vpop.f32.mrf.mxu0
        %v570 = vadd.f32 0.0, %v569
        %571 = vdwg.mxu0
        %v572 = vadd.f32 %v499, %v568
        %v573 = vadd.f32 %v500, %v570
        %574 = vst [vmem:[#allocation2] sm:$0xff] %v572
        %575 = vst [vmem:[#allocation2 + $0x8] sm:$0xff] %v573
        %v576 = vld [vmem:[#allocation2] sm:$0xff]
        %v577 = vld [vmem:[#allocation2 + $0x8] sm:$0xff]
        %578 = vst [vmem:[%s269] sm:$0xff] %v576
        %579 = vst [vmem:[%s269 + $0x8] sm:$0xff] %v577
        %s580 = sand.u32 %s141, 1
        %s581 = scalar_lea.sflag [#allocation5], %s580
        %s582 = sand.u32 %s141, 1
        %s583 = smul.addr %s582, 16
        %s584 = scalar_lea.vmem [#allocation9], %s583
        // Predicated region
        $region53: #{tpu_custom_call.1} parent=39 // pred_check
          %p585 = pneg %p151
        $region54: #{tpu_custom_call.1} parent=39 // pred_check_branch
          %587 = sbr.rel (%p585) target = $region56
        $region55: #{tpu_custom_call.1} parent=39 // pred_region
          %s589 = ssub.s32 256, 256
          %590 = vsyncadd %s581, %s589
          %s591 = smul.addr %s23, 2
          %s592 = smul.addr %s591, 128
          %s593 = scalar_lea.hbm %s5, %s592
          %s595 = sshll.u32 %s584, 4
          %s596 = int_to_ptr.vmem [resolvable:$true] %s595
          %598 = dma.vmem_to_hbm [thread:$0]  %s596, 256, %s593, %s581
        $region56: #{tpu_custom_call.1} parent=39 // pred_fallthru
          _
      $region40: #{tpu_custom_call.1} parent=5 // pred_fallthru
        _
      %p599 = scmp.le.s32.totalorder 2, %s18
      // Predicated region
      $region57: #{tpu_custom_call.1} parent=5 // pred_check
        %p600 = pneg %p599
      $region58: #{tpu_custom_call.1} parent=5 // pred_check_branch
        %602 = sbr.rel (%p600) target = $region60
      $region59: #{tpu_custom_call.1} parent=5 // pred_region
        %s603 = ssub.s32 %s18, 2
        // Predicated region
        $region61: #{tpu_custom_call.1} parent=59 // pred_check
          %p604 = pneg %p157
        $region62: #{tpu_custom_call.1} parent=59 // pred_check_branch
          %606 = sbr.rel (%p604) target = $region64
        $region63: #{tpu_custom_call.1} parent=59 // pred_region
          %s607 = sand.u32 %s142, 1
          %s608 = scalar_lea.sflag [#allocation5], %s607
          %s609 = sand.u32 %s142, 1
          %s610 = smul.addr %s609, 16
          %s611 = scalar_lea.vmem [#allocation9], %s610
          %612 = dma.done %s608, 256
        $region64: #{tpu_custom_call.1} parent=59 // pred_fallthru
          _
      $region60: #{tpu_custom_call.1} parent=5 // pred_fallthru
        _
    $region6: #{tpu_custom_call.1} parent=1 // loop_footer
      %s22 = sadd.s32 1, %s18
    $region7: #{tpu_custom_call.1} parent=1 // loop_footer_branch
      %17 = sbr.rel target = $region3
    $region8: #{tpu_custom_call.1} parent=1 // loop_exit
      _
    %613 = vsyncpa [#allocation4], 1
    %s614 = scalar_lea.sflag [#allocation4], 1
    %615 = vsyncpa %s614, 1
    %616 = vsyncpa [#allocation7], 1
    %617 = vsyncpa [#allocation5], 1
    %s618 = scalar_lea.sflag [#allocation5], 1
    %619 = vsyncpa %s618, 1

// kernel: tpu_custom_call.1
$region0: #{tpu_custom_call.1}
  #allocation0 [shape = 'u32[]', space=smem, size = 0x4, offset = 0x4, fixed_abs, tag = 'smem constant byte address 0x4 - core index']
  #allocation1 [shape = 'u32[144,128]{1,0:T(1,128)}', space=vmem, size = 0x12000, scoped, tag = 'internal scratch']
  #allocation2 [shape = 'f32[8,256]{1,0:T(8,128)}', space=vmem, size = 0x2000, scoped, tag = 'scratch operand']
  %s0 = inlined_call_operand.hbm [shape: f32[16,256], index: 0, kind: input, shape index: {}]
  %s1 = inlined_call_operand.hbm [shape: f32[1,256,256], index: 1, kind: input, shape index: {}]
  %s2 = inlined_call_operand.vmem [shape: f32[1,1,256], index: 2, kind: input, shape index: {}]
  %s3 = inlined_call_operand.hbm [shape: f32[1,256,256], index: 3, kind: input, shape index: {}]
  %s4 = inlined_call_operand.vmem [shape: f32[1,256], index: 4, kind: input, shape index: {}]
  %s5 = inlined_call_operand.hbm [shape: f32[16,256], index: 5, kind: output, shape index: {}]
  %s6 = sld [smem:[#allocation0]]
  $region65: #{tpu_custom_call.1} parent=0
    _
  %s8 = ssub.s32 1, %s6
  %s9 = scalar_select 0, %s8, %s6
  $region1: #{tpu_custom_call.1} parent=0
    #allocation3 [shape = 'u8[16384]{0}', space=vmem, size = 0x4000, scoped, tag = 'input window, operand 0']
    #allocation4 [shape = 's32[2]{0}', space=sflag, size = 0x8, scoped, tag = 'scoped memory for tpu_custom_call.1']
    #allocation5 [shape = 's32[2]{0}', space=sflag, size = 0x8, scoped, tag = 'scoped memory for tpu_custom_call.1']
    #allocation6 [shape = 'u8[262144]{0}', space=vmem, size = 0x40000, scoped, tag = 'input window, operand 1, single buffered']
    #allocation7 [shape = 's32[1]{0}', space=sflag, size = 0x4, scoped, tag = 'scoped memory for tpu_custom_call.1']
    #allocation8 [shape = 'u8[262144]{0}', space=vmem, size = 0x40000, scoped, tag = 'input window, operand 3, single buffered']
    #allocation9 [shape = 'u8[16384]{0}', space=vmem, size = 0x4000, scoped, tag = 'output window, operand 0']
    %10 = vsyncpa [#allocation4], 0
    %s11 = scalar_lea.sflag [#allocation4], 1
    %12 = vsyncpa %s11, 0
    %13 = vsyncpa [#allocation7], 0
    %14 = vsyncpa [#allocation5], 0
    %s15 = scalar_lea.sflag [#allocation5], 1
    %16 = vsyncpa %s15, 0
    loop: start=0, step=1, limit=4
    $region2: #{tpu_custom_call.1} parent=1 // loop_pre_header
      _
    $region3: #{tpu_custom_call.1} parent=1 // loop_header
      %s18 = sphi 0, %s22
      %p19 = scmp.ge.s32.totalorder %s18, 4
      %s28 = sphi 0, %s30
      %s31 = sphi 0, %s28
      %s32 = sphi 0, %s31
      %s48 = sphi 0, %s32
      %s52 = sphi 0, %s52
      %s54 = sphi 0, %s52
      %s55 = sphi 0, %s54
      %s69 = sphi 0, %s55
      %s73 = sphi 0, %s73
      %s75 = sphi 0, %s73
      %s76 = sphi 0, %s75
      %s90 = sphi 0, %s76
      %s94 = sphi 0, %s94
      %s96 = sphi 0, %s94
      %s97 = sphi 0, %s96
      %s111 = sphi 0, %s97
      %s115 = sphi 0, %s115
      %s117 = sphi 0, %s115
      %s118 = sphi 0, %s117
      %s132 = sphi 0, %s118
      %s138 = sphi 0, %s140
      %s141 = sphi 0, %s138
      %s142 = sphi 0, %s141
      %s158 = sphi 0, %s142
    $region4: #{tpu_custom_call.1} parent=1 // loop_header_branch
      %21 = sbr.rel (%p19) target = $region8
    $region5: #{tpu_custom_call.1} parent=1 // loop_body
      %s23 = ssub.s32 %s18, 1
      %s24 = ssub.s32 %s18, 2
      %s25 = sadd.s32 %s18, 1
      %s26 = ssub.s32 %s18, %s25
      %p27 = scmp.eq.s32.totalorder %s26, 0
      %s29 = sadd.s32 %s28, 1
      %s30 = scalar_select %p27, %s28, %s29
      %p33 = pneg %p27
      %p34 = scmp.eq.s32.totalorder %s18, 1
      %p35 = por %p33, %p34
      %p36 = scmp.ne.s32.totalorder %s28, %s31
      %p37 = scmp.eq.s32.totalorder %s18, 0
      %p38 = por %p36, %p37
      %p39 = scmp.ne.s32.totalorder %s28, %s31
      %p40 = scmp.eq.s32.totalorder %s23, 1
      %p41 = por %p39, %p40
      %p42 = scmp.ne.s32.totalorder %s31, %s32
      %p43 = scmp.eq.s32.totalorder %s23, 0
      %p44 = por %p42, %p43
      %p45 = scmp.ne.s32.totalorder %s31, %s32
      %p46 = scmp.eq.s32.totalorder %s24, 1
      %p47 = por %p45, %p46
      %p49 = scmp.ne.s32.totalorder %s32, %s48
      %p50 = scmp.eq.s32.totalorder %s24, 0
      %p51 = por %p49, %p50
      %s53 = sadd.s32 %s52, 1
      %p56 = scmp.eq.s32.totalorder %s18, 1
      %p57 = scmp.ne.s32.totalorder %s52, %s54
      %p58 = scmp.eq.s32.totalorder %s18, 0
      %p59 = por %p57, %p58
      %p60 = scmp.ne.s32.totalorder %s52, %s54
      %p61 = scmp.eq.s32.totalorder %s23, 1
      %p62 = por %p60, %p61
      %p63 = scmp.ne.s32.totalorder %s54, %s55
      %p64 = scmp.eq.s32.totalorder %s23, 0
      %p65 = por %p63, %p64
      %p66 = scmp.ne.s32.totalorder %s54, %s55
      %p67 = scmp.eq.s32.totalorder %s24, 1
      %p68 = por %p66, %p67
      %p70 = scmp.ne.s32.totalorder %s55, %s69
      %p71 = scmp.eq.s32.totalorder %s24, 0
      %p72 = por %p70, %p71
      %s74 = sadd.s32 %s73, 1
      %p77 = scmp.eq.s32.totalorder %s18, 1
      %p78 = scmp.ne.s32.totalorder %s73, %s75
      %p79 = scmp.eq.s32.totalorder %s18, 0
      %p80 = por %p78, %p79
      %p81 = scmp.ne.s32.totalorder %s73, %s75
      %p82 = scmp.eq.s32.totalorder %s23, 1
      %p83 = por %p81, %p82
      %p84 = scmp.ne.s32.totalorder %s75, %s76
      %p85 = scmp.eq.s32.totalorder %s23, 0
      %p86 = por %p84, %p85
      %p87 = scmp.ne.s32.totalorder %s75, %s76
      %p88 = scmp.eq.s32.totalorder %s24, 1
      %p89 = por %p87, %p88
      %p91 = scmp.ne.s32.totalorder %s76, %s90
      %p92 = scmp.eq.s32.totalorder %s24, 0
      %p93 = por %p91, %p92
      %s95 = sadd.s32 %s94, 1
      %p98 = scmp.eq.s32.totalorder %s18, 1
      %p99 = scmp.ne.s32.totalorder %s94, %s96
      %p100 = scmp.eq.s32.totalorder %s18, 0
      %p101 = por %p99, %p100
      %p102 = scmp.ne.s32.totalorder %s94, %s96
      %p103 = scmp.eq.s32.totalorder %s23, 1
      %p104 = por %p102, %p103
      %p105 = scmp.ne.s32.totalorder %s96, %s97
      %p106 = scmp.eq.s32.totalorder %s23, 0
      %p107 = por %p105, %p106
      %p108 = scmp.ne.s32.totalorder %s96, %s97
      %p109 = scmp.eq.s32.totalorder %s24, 1
      %p110 = por %p108, %p109
      %p112 = scmp.ne.s32.totalorder %s97, %s111
      %p113 = scmp.eq.s32.totalorder %s24, 0
      %p114 = por %p112, %p113
      %s116 = sadd.s32 %s115, 1
      %p119 = scmp.eq.s32.totalorder %s18, 1
      %p120 = scmp.ne.s32.totalorder %s115, %s117
      %p121 = scmp.eq.s32.totalorder %s18, 0
      %p122 = por %p120, %p121
      %p123 = scmp.ne.s32.totalorder %s115, %s117
      %p124 = scmp.eq.s32.totalorder %s23, 1
      %p125 = por %p123, %p124
      %p126 = scmp.ne.s32.totalorder %s117, %s118
      %p127 = scmp.eq.s32.totalorder %s23, 0
      %p128 = por %p126, %p127
      %p129 = scmp.ne.s32.totalorder %s117, %s118
      %p130 = scmp.eq.s32.totalorder %s24, 1
      %p131 = por %p129, %p130
      %p133 = scmp.ne.s32.totalorder %s118, %s132
      %p134 = scmp.eq.s32.totalorder %s24, 0
      %p135 = por %p133, %p134
      %s136 = ssub.s32 %s18, %s25
      %p137 = scmp.eq.s32.totalorder %s136, 0
      %s139 = sadd.s32 %s138, 1
      %s140 = scalar_select %p137, %s138, %s139
      %p143 = pneg %p137
      %p144 = scmp.eq.s32.totalorder %s18, 1
      %p145 = por %p143, %p144
      %p146 = scmp.ne.s32.totalorder %s138, %s141
      %p147 = scmp.eq.s32.totalorder %s18, 0
      %p148 = por %p146, %p147
      %p149 = scmp.ne.s32.totalorder %s138, %s141
      %p150 = scmp.eq.s32.totalorder %s23, 1
      %p151 = por %p149, %p150
      %p152 = scmp.ne.s32.totalorder %s141, %s142
      %p153 = scmp.eq.s32.totalorder %s23, 0
      %p154 = por %p152, %p153
      %p155 = scmp.ne.s32.totalorder %s141, %s142
      %p156 = scmp.eq.s32.totalorder %s24, 1
      %p157 = por %p155, %p156
      %p159 = scmp.ne.s32.totalorder %s142, %s158
      %p160 = scmp.eq.s32.totalorder %s24, 0
      %p161 = por %p159, %p160
      %p162 = scmp.le.s32.totalorder 1, %s18
      %p163 = scmp.lt.s32.totalorder %s18, 3
      %p164 = pnand %p162, %p163
      %p165 = pneg %p164
      // Predicated region
      $region9: #{tpu_custom_call.1} parent=5 // pred_check
        _
      $region10: #{tpu_custom_call.1} parent=5 // pred_check_branch
        %167 = sbr.rel (%p164) target = $region12
      $region11: #{tpu_custom_call.1} parent=5 // pred_region
        %s168 = ssub.s32 %s18, 1
        // Predicated region
        $region13: #{tpu_custom_call.1} parent=11 // pred_check
          %p169 = pneg %p65
        $region14: #{tpu_custom_call.1} parent=11 // pred_check_branch
          %171 = sbr.rel (%p169) target = $region16
        $region15: #{tpu_custom_call.1} parent=11 // pred_region
          %s173 = ssub.s32 8192, 8192
          %174 = vsyncadd [#allocation7], %s173
          %s175 = sshll.u32 [#allocation6], 4
          %s176 = int_to_ptr.vmem [resolvable:$true] %s175
          %181 = dma.hbm_to_vmem [thread:$0]  %s1, 8192, %s176, [#allocation7], 256, 256, 16
        $region16: #{tpu_custom_call.1} parent=11 // pred_fallthru
          _
        // Predicated region
        $region17: #{tpu_custom_call.1} parent=11 // pred_check
          %p182 = pneg %p86
        $region18: #{tpu_custom_call.1} parent=11 // pred_check_branch
          %184 = sbr.rel (%p182) target = $region20
        $region19: #{tpu_custom_call.1} parent=11 // pred_region
          _
        $region20: #{tpu_custom_call.1} parent=11 // pred_fallthru
          _
        // Predicated region
        $region21: #{tpu_custom_call.1} parent=11 // pred_check
          %p185 = pneg %p107
        $region22: #{tpu_custom_call.1} parent=11 // pred_check_branch
          %187 = sbr.rel (%p185) target = $region24
        $region23: #{tpu_custom_call.1} parent=11 // pred_region
          %s189 = ssub.s32 8192, 8192
          %190 = vsyncadd [#allocation7], %s189
          %s191 = sshll.u32 [#allocation8], 4
          %s192 = int_to_ptr.vmem [resolvable:$true] %s191
          %197 = dma.hbm_to_vmem [thread:$0]  %s3, 8192, %s192, [#allocation7], 256, 256, 16
        $region24: #{tpu_custom_call.1} parent=11 // pred_fallthru
          _
        // Predicated region
        $region25: #{tpu_custom_call.1} parent=11 // pred_check
          %p198 = pneg %p128
        $region26: #{tpu_custom_call.1} parent=11 // pred_check_branch
          %200 = sbr.rel (%p198) target = $region28
        $region27: #{tpu_custom_call.1} parent=11 // pred_region
          _
        $region28: #{tpu_custom_call.1} parent=11 // pred_fallthru
          _
      $region12: #{tpu_custom_call.1} parent=5 // pred_fallthru
        _
      %p201 = scmp.lt.s32.totalorder %s18, 2
      // Predicated region
      $region29: #{tpu_custom_call.1} parent=5 // pred_check
        %p202 = pneg %p201
      $region30: #{tpu_custom_call.1} parent=5 // pred_check_branch
        %204 = sbr.rel (%p202) target = $region32
      $region31: #{tpu_custom_call.1} parent=5 // pred_region
        // Predicated region
        $region33: #{tpu_custom_call.1} parent=31 // pred_check
          %p205 = pneg %p38
        $region34: #{tpu_custom_call.1} parent=31 // pred_check_branch
          %207 = sbr.rel (%p205) target = $region36
        $region35: #{tpu_custom_call.1} parent=31 // pred_region
          %s208 = sand.u32 %s28, 1
          %s209 = scalar_lea.sflag [#allocation4], %s208
          %s210 = sand.u32 %s28, 1
          %s211 = smul.addr %s210, 16
          %s212 = scalar_lea.vmem [#allocation3], %s211
          %s214 = ssub.s32 256, 256
          %215 = vsyncadd %s209, %s214
          %s216 = smul.addr %s18, 2
          %s217 = smul.addr %s216, 128
          %s218 = scalar_lea.hbm %s0, %s217
          %s220 = sshll.u32 %s212, 4
          %s221 = int_to_ptr.vmem [resolvable:$true] %s220
          %223 = dma.hbm_to_vmem [thread:$0]  %s218, 256, %s221, %s209
        $region36: #{tpu_custom_call.1} parent=31 // pred_fallthru
          _
      $region32: #{tpu_custom_call.1} parent=5 // pred_fallthru
        _
      %p224 = scmp.le.s32.totalorder 1, %s18
      %p225 = scmp.lt.s32.totalorder %s18, 3
      %p226 = pnand %p224, %p225
      %p227 = pneg %p226
      // Predicated region
      $region37: #{tpu_custom_call.1} parent=5 // pred_check
        _
      $region38: #{tpu_custom_call.1} parent=5 // pred_check_branch
        %229 = sbr.rel (%p226) target = $region40
      $region39: #{tpu_custom_call.1} parent=5 // pred_region
        %s230 = ssub.s32 %s18, 1
        %s231 = sand.u32 %s31, 1
        %s232 = scalar_lea.sflag [#allocation4], %s231
        %s233 = sand.u32 %s31, 1
        %s234 = smul.addr %s233, 16
        %s235 = scalar_lea.vmem [#allocation3], %s234
        // Predicated region
        $region41: #{tpu_custom_call.1} parent=39 // pred_check
          %p236 = pneg %p44
        $region42: #{tpu_custom_call.1} parent=39 // pred_check_branch
          %238 = sbr.rel (%p236) target = $region44
        $region43: #{tpu_custom_call.1} parent=39 // pred_region
          %239 = dma.done %s232, 256
        $region44: #{tpu_custom_call.1} parent=39 // pred_fallthru
          _
        // Predicated region
        $region45: #{tpu_custom_call.1} parent=39 // pred_check
          %p240 = pneg %p65
        $region46: #{tpu_custom_call.1} parent=39 // pred_check_branch
          %242 = sbr.rel (%p240) target = $region48
        $region47: #{tpu_custom_call.1} parent=39 // pred_region
          %243 = dma.done [#allocation7], 8192
        $region48: #{tpu_custom_call.1} parent=39 // pred_fallthru
          _
        // Predicated region
        $region49: #{tpu_custom_call.1} parent=39 // pred_check
          %p244 = pneg %p107
        $region50: #{tpu_custom_call.1} parent=39 // pred_check_branch
          %246 = sbr.rel (%p244) target = $region52
        $region51: #{tpu_custom_call.1} parent=39 // pred_region
          %247 = dma.done [#allocation7], 8192
        $region52: #{tpu_custom_call.1} parent=39 // pred_fallthru
          _
        %s248 = sand.u32 %s31, 1
        %s249 = scalar_lea.sflag [#allocation4], %s248
        %s250 = sand.u32 %s31, 1
        %s251 = smul.addr %s250, 16
        %s252 = scalar_lea.vmem [#allocation3], %s251
        %p253 = pneg %p44
        %p254 = pneg %p41
        %p255 = pneg %p65
        %p256 = pneg %p62
        %p257 = pneg %p86
        %p258 = pneg %p83
        %p259 = pneg %p107
        %p260 = pneg %p104
        %p261 = pneg %p128
        %p262 = pneg %p125
        %p263 = pneg %p154
        %p264 = pneg %p151
        %s265 = sand.u32 %s141, 1
        %s266 = scalar_lea.sflag [#allocation5], %s265
        %s267 = sand.u32 %s141, 1
        %s268 = smul.addr %s267, 16
        %s269 = scalar_lea.vmem [#allocation9], %s268
        %v270 = vld [vmem:[%s4] sm:$0x3]
        %v272 = vlaneseq
        %v273 = vshrl.u32 %v272, 7
        %v274 = vsub.s32 0, %v273
        %v275 = vrot.slane %v270, %v274
        %v276 = vlaneseq
        %v277 = vshrl.u32 %v276, 7
        %v278 = vsub.s32 1, %v277
        %v279 = vrot.slane %v270, %v278
        %282 = vst [vmem:[#allocation2] sm:$0xff] %v275
        %283 = vst [vmem:[#allocation2 + $0x8] sm:$0xff] %v279
        %v284 = vld [vmem:[#allocation6] sm:$0xff]
        %v285 = vld [vmem:[#allocation6 + $0x8] sm:$0xff]
        %v286 = vld [vmem:[#allocation6 + $0x10] sm:$0xff]
        %v287 = vld [vmem:[#allocation6 + $0x18] sm:$0xff]
        %v288 = vld [vmem:[#allocation6 + $0x20] sm:$0xff]
        %v289 = vld [vmem:[#allocation6 + $0x28] sm:$0xff]
        %v290 = vld [vmem:[#allocation6 + $0x30] sm:$0xff]
        %v291 = vld [vmem:[#allocation6 + $0x38] sm:$0xff]
        %v292 = vld [vmem:[#allocation6 + $0x40] sm:$0xff]
        %v293 = vld [vmem:[#allocation6 + $0x48] sm:$0xff]
        %v294 = vld [vmem:[#allocation6 + $0x50] sm:$0xff]
        %v295 = vld [vmem:[#allocation6 + $0x58] sm:$0xff]
        %v296 = vld [vmem:[#allocation6 + $0x60] sm:$0xff]
        %v297 = vld [vmem:[#allocation6 + $0x68] sm:$0xff]
        %v298 = vld [vmem:[#allocation6 + $0x70] sm:$0xff]
        %v299 = vld [vmem:[#allocation6 + $0x78] sm:$0xff]
        %v300 = vld [vmem:[#allocation6 + $0x80] sm:$0xff]
        %v301 = vld [vmem:[#allocation6 + $0x88] sm:$0xff]
        %v302 = vld [vmem:[#allocation6 + $0x90] sm:$0xff]
        %v303 = vld [vmem:[#allocation6 + $0x98] sm:$0xff]
        %v304 = vld [vmem:[#allocation6 + $0xa0] sm:$0xff]
        %v305 = vld [vmem:[#allocation6 + $0xa8] sm:$0xff]
        %v306 = vld [vmem:[#allocation6 + $0xb0] sm:$0xff]
        %v307 = vld [vmem:[#allocation6 + $0xb8] sm:$0xff]
        %v308 = vld [vmem:[#allocation6 + $0xc0] sm:$0xff]
        %v309 = vld [vmem:[#allocation6 + $0xc8] sm:$0xff]
        %v310 = vld [vmem:[#allocation6 + $0xd0] sm:$0xff]
        %v311 = vld [vmem:[#allocation6 + $0xd8] sm:$0xff]
        %v312 = vld [vmem:[#allocation6 + $0xe0] sm:$0xff]
        %v313 = vld [vmem:[#allocation6 + $0xe8] sm:$0xff]
        %v314 = vld [vmem:[#allocation6 + $0xf0] sm:$0xff]
        %v315 = vld [vmem:[#allocation6 + $0xf8] sm:$0xff]
        %v316 = vld [vmem:[#allocation6 + $0x100] sm:$0xff]
        %v317 = vld [vmem:[#allocation6 + $0x108] sm:$0xff]
        %v318 = vld [vmem:[#allocation6 + $0x110] sm:$0xff]
        %v319 = vld [vmem:[#allocation6 + $0x118] sm:$0xff]
        %v320 = vld [vmem:[#allocation6 + $0x120] sm:$0xff]
        %v321 = vld [vmem:[#allocation6 + $0x128] sm:$0xff]
        %v322 = vld [vmem:[#allocation6 + $0x130] sm:$0xff]
        %v323 = vld [vmem:[#allocation6 + $0x138] sm:$0xff]
        %v324 = vld [vmem:[#allocation6 + $0x140] sm:$0xff]
        %v325 = vld [vmem:[#allocation6 + $0x148] sm:$0xff]
        %v326 = vld [vmem:[#allocation6 + $0x150] sm:$0xff]
        %v327 = vld [vmem:[#allocation6 + $0x158] sm:$0xff]
        %v328 = vld [vmem:[#allocation6 + $0x160] sm:$0xff]
        %v329 = vld [vmem:[#allocation6 + $0x168] sm:$0xff]
        %v330 = vld [vmem:[#allocation6 + $0x170] sm:$0xff]
        %v331 = vld [vmem:[#allocation6 + $0x178] sm:$0xff]
        %v332 = vld [vmem:[#allocation6 + $0x180] sm:$0xff]
        %v333 = vld [vmem:[#allocation6 + $0x188] sm:$0xff]
        %v334 = vld [vmem:[#allocation6 + $0x190] sm:$0xff]
        %v335 = vld [vmem:[#allocation6 + $0x198] sm:$0xff]
        %v336 = vld [vmem:[#allocation6 + $0x1a0] sm:$0xff]
        %v337 = vld [vmem:[#allocation6 + $0x1a8] sm:$0xff]
        %v338 = vld [vmem:[#allocation6 + $0x1b0] sm:$0xff]
        %v339 = vld [vmem:[#allocation6 + $0x1b8] sm:$0xff]
        %v340 = vld [vmem:[#allocation6 + $0x1c0] sm:$0xff]
        %v341 = vld [vmem:[#allocation6 + $0x1c8] sm:$0xff]
        %v342 = vld [vmem:[#allocation6 + $0x1d0] sm:$0xff]
        %v343 = vld [vmem:[#allocation6 + $0x1d8] sm:$0xff]
        %v344 = vld [vmem:[#allocation6 + $0x1e0] sm:$0xff]
        %v345 = vld [vmem:[#allocation6 + $0x1e8] sm:$0xff]
        %v346 = vld [vmem:[#allocation6 + $0x1f0] sm:$0xff]
        %v347 = vld [vmem:[#allocation6 + $0x1f8] sm:$0xff]
        %v348 = vld [vmem:[%s2] sm:$0x3]
        %v349 = vld [vmem:[#allocation8] sm:$0xff]
        %v350 = vld [vmem:[#allocation8 + $0x8] sm:$0xff]
        %v351 = vld [vmem:[#allocation8 + $0x10] sm:$0xff]
        %v352 = vld [vmem:[#allocation8 + $0x18] sm:$0xff]
        %v353 = vld [vmem:[#allocation8 + $0x20] sm:$0xff]
        %v354 = vld [vmem:[#allocation8 + $0x28] sm:$0xff]
        %v355 = vld [vmem:[#allocation8 + $0x30] sm:$0xff]
        %v356 = vld [vmem:[#allocation8 + $0x38] sm:$0xff]
        %v357 = vld [vmem:[#allocation8 + $0x40] sm:$0xff]
        %v358 = vld [vmem:[#allocation8 + $0x48] sm:$0xff]
        %v359 = vld [vmem:[#allocation8 + $0x50] sm:$0xff]
        %v360 = vld [vmem:[#allocation8 + $0x58] sm:$0xff]
        %v361 = vld [vmem:[#allocation8 + $0x60] sm:$0xff]
        %v362 = vld [vmem:[#allocation8 + $0x68] sm:$0xff]
        %v363 = vld [vmem:[#allocation8 + $0x70] sm:$0xff]
        %v364 = vld [vmem:[#allocation8 + $0x78] sm:$0xff]
        %v365 = vld [vmem:[#allocation8 + $0x80] sm:$0xff]
        %v366 = vld [vmem:[#allocation8 + $0x88] sm:$0xff]
        %v367 = vld [vmem:[#allocation8 + $0x90] sm:$0xff]
        %v368 = vld [vmem:[#allocation8 + $0x98] sm:$0xff]
        %v369 = vld [vmem:[#allocation8 + $0xa0] sm:$0xff]
        %v370 = vld [vmem:[#allocation8 + $0xa8] sm:$0xff]
        %v371 = vld [vmem:[#allocation8 + $0xb0] sm:$0xff]
        %v372 = vld [vmem:[#allocation8 + $0xb8] sm:$0xff]
        %v373 = vld [vmem:[#allocation8 + $0xc0] sm:$0xff]
        %v374 = vld [vmem:[#allocation8 + $0xc8] sm:$0xff]
        %v375 = vld [vmem:[#allocation8 + $0xd0] sm:$0xff]
        %v376 = vld [vmem:[#allocation8 + $0xd8] sm:$0xff]
        %v377 = vld [vmem:[#allocation8 + $0xe0] sm:$0xff]
        %v378 = vld [vmem:[#allocation8 + $0xe8] sm:$0xff]
        %v379 = vld [vmem:[#allocation8 + $0xf0] sm:$0xff]
        %v380 = vld [vmem:[#allocation8 + $0xf8] sm:$0xff]
        %v381 = vld [vmem:[#allocation8 + $0x100] sm:$0xff]
        %v382 = vld [vmem:[#allocation8 + $0x108] sm:$0xff]
        %v383 = vld [vmem:[#allocation8 + $0x110] sm:$0xff]
        %v384 = vld [vmem:[#allocation8 + $0x118] sm:$0xff]
        %v385 = vld [vmem:[#allocation8 + $0x120] sm:$0xff]
        %v386 = vld [vmem:[#allocation8 + $0x128] sm:$0xff]
        %v387 = vld [vmem:[#allocation8 + $0x130] sm:$0xff]
        %v388 = vld [vmem:[#allocation8 + $0x138] sm:$0xff]
        %v389 = vld [vmem:[#allocation8 + $0x140] sm:$0xff]
        %v390 = vld [vmem:[#allocation8 + $0x148] sm:$0xff]
        %v391 = vld [vmem:[#allocation8 + $0x150] sm:$0xff]
        %v392 = vld [vmem:[#allocation8 + $0x158] sm:$0xff]
        %v393 = vld [vmem:[#allocation8 + $0x160] sm:$0xff]
        %v394 = vld [vmem:[#allocation8 + $0x168] sm:$0xff]
        %v395 = vld [vmem:[#allocation8 + $0x170] sm:$0xff]
        %v396 = vld [vmem:[#allocation8 + $0x178] sm:$0xff]
        %v397 = vld [vmem:[#allocation8 + $0x180] sm:$0xff]
        %v398 = vld [vmem:[#allocation8 + $0x188] sm:$0xff]
        %v399 = vld [vmem:[#allocation8 + $0x190] sm:$0xff]
        %v400 = vld [vmem:[#allocation8 + $0x198] sm:$0xff]
        %v401 = vld [vmem:[#allocation8 + $0x1a0] sm:$0xff]
        %v402 = vld [vmem:[#allocation8 + $0x1a8] sm:$0xff]
        %v403 = vld [vmem:[#allocation8 + $0x1b0] sm:$0xff]
        %v404 = vld [vmem:[#allocation8 + $0x1b8] sm:$0xff]
        %v405 = vld [vmem:[#allocation8 + $0x1c0] sm:$0xff]
        %v406 = vld [vmem:[#allocation8 + $0x1c8] sm:$0xff]
        %v407 = vld [vmem:[#allocation8 + $0x1d0] sm:$0xff]
        %v408 = vld [vmem:[#allocation8 + $0x1d8] sm:$0xff]
        %v409 = vld [vmem:[#allocation8 + $0x1e0] sm:$0xff]
        %v410 = vld [vmem:[#allocation8 + $0x1e8] sm:$0xff]
        %v411 = vld [vmem:[#allocation8 + $0x1f0] sm:$0xff]
        %v412 = vld [vmem:[#allocation8 + $0x1f8] sm:$0xff]
        %v413 = vld [vmem:[%s235] sm:$0xff]
        %v414 = vld [vmem:[%s235 + $0x8] sm:$0xff]
        %v416 = vlaneseq
        %v417 = vshrl.u32 %v416, 7
        %v418 = vsub.s32 0, %v417
        %v419 = vrot.slane %v348, %v418
        %v420 = vlaneseq
        %v421 = vshrl.u32 %v420, 7
        %v422 = vsub.s32 1, %v421
        %v423 = vrot.slane %v348, %v422
        %426 = vmatprep.subr.mxu0 %v315
        %427 = vmatpush1.msra.mxu0 %v314
        %428 = vmatprep.subr.mxu0 %v313
        %429 = vmatpush1.msra.mxu0 %v312
        %430 = vmatprep.subr.mxu0 %v311
        %431 = vmatpush1.msra.mxu0 %v310
        %432 = vmatprep.subr.mxu0 %v309
        %433 = vmatpush1.msra.mxu0 %v308
        %434 = vmatprep.subr.mxu0 %v307
        %435 = vmatpush1.msra.mxu0 %v306
        %436 = vmatprep.subr.mxu0 %v305
        %437 = vmatpush1.msra.mxu0 %v304
        %438 = vmatprep.subr.mxu0 %v303
        %439 = vmatpush1.msra.mxu0 %v302
        %440 = vmatprep.subr.mxu0 %v301
        %441 = vmatpush1.msra.mxu0 %v300
        %442 = vmatprep.subr.mxu0 %v299
        %443 = vmatpush1.msra.mxu0 %v298
        %444 = vmatprep.subr.mxu0 %v297
        %445 = vmatpush1.msra.mxu0 %v296
        %446 = vmatprep.subr.mxu0 %v295
        %447 = vmatpush1.msra.mxu0 %v294
        %448 = vmatprep.subr.mxu0 %v293
        %449 = vmatpush1.msra.mxu0 %v292
        %450 = vmatprep.subr.mxu0 %v291
        %451 = vmatpush1.msra.mxu0 %v290
        %452 = vmatprep.subr.mxu0 %v289
        %453 = vmatpush1.msra.mxu0 %v288
        %454 = vmatprep.subr.mxu0 %v287
        %455 = vmatpush1.msra.mxu0 %v286
        %456 = vmatprep.subr.mxu0 %v285
        %457 = vmatpush1.msra.mxu0 %v284
        %458 = vmatprep.subr.mxu0 %v347
        %459 = vmatpush2.msra.mxu0 %v346
        %460 = vmatprep.subr.mxu0 %v345
        %461 = vmatpush2.msra.mxu0 %v344
        %462 = vmatprep.subr.mxu0 %v343
        %463 = vmatpush2.msra.mxu0 %v342
        %464 = vmatprep.subr.mxu0 %v341
        %465 = vmatpush2.msra.mxu0 %v340
        %466 = vmatprep.subr.mxu0 %v339
        %467 = vmatpush2.msra.mxu0 %v338
        %468 = vmatprep.subr.mxu0 %v337
        %469 = vmatpush2.msra.mxu0 %v336
        %470 = vmatprep.subr.mxu0 %v335
        %471 = vmatpush2.msra.mxu0 %v334
        %472 = vmatprep.subr.mxu0 %v333
        %473 = vmatpush2.msra.mxu0 %v332
        %474 = vmatprep.subr.mxu0 %v331
        %475 = vmatpush2.msra.mxu0 %v330
        %476 = vmatprep.subr.mxu0 %v329
        %477 = vmatpush2.msra.mxu0 %v328
        %478 = vmatprep.subr.mxu0 %v327
        %479 = vmatpush2.msra.mxu0 %v326
        %480 = vmatprep.subr.mxu0 %v325
        %481 = vmatpush2.msra.mxu0 %v324
        %482 = vmatprep.subr.mxu0 %v323
        %483 = vmatpush2.msra.mxu0 %v322
        %484 = vmatprep.subr.mxu0 %v321
        %485 = vmatpush2.msra.mxu0 %v320
        %486 = vmatprep.subr.mxu0 %v319
        %487 = vmatpush2.msra.mxu0 %v318
        %488 = vmatprep.subr.mxu0 %v317
        %489 = vmatpush2.msra.mxu0 %v316
        %490 = vmatprep.mubr.f32.mxu0 %v414
        %491 = vmatmul.mubr.f32.gmra.mxu0 %v413
        %v492 = vpop.f32.mrf.mxu0
        %v493 = vadd.f32 %v419, %v492
        %v494 = vpop.f32.mrf.mxu0
        %v495 = vadd.f32 %v423, %v494
        %496 = vdwg.mxu0
        %v497 = vmax.f32 %v493, 0.0
        %v498 = vmax.f32 %v495, 0.0
        %v499 = vld [vmem:[#allocation2] sm:$0xff]
        %v500 = vld [vmem:[#allocation2 + $0x8] sm:$0xff]
        %501 = vmatprep.subr.mxu0 %v380
        %502 = vmatpush1.msra.mxu0 %v379
        %503 = vmatprep.subr.mxu0 %v378
        %504 = vmatpush1.msra.mxu0 %v377
        %505 = vmatprep.subr.mxu0 %v376
        %506 = vmatpush1.msra.mxu0 %v375
        %507 = vmatprep.subr.mxu0 %v374
        %508 = vmatpush1.msra.mxu0 %v373
        %509 = vmatprep.subr.mxu0 %v372
        %510 = vmatpush1.msra.mxu0 %v371
        %511 = vmatprep.subr.mxu0 %v370
        %512 = vmatpush1.msra.mxu0 %v369
        %513 = vmatprep.subr.mxu0 %v368
        %514 = vmatpush1.msra.mxu0 %v367
        %515 = vmatprep.subr.mxu0 %v366
        %516 = vmatpush1.msra.mxu0 %v365
        %517 = vmatprep.subr.mxu0 %v364
        %518 = vmatpush1.msra.mxu0 %v363
        %519 = vmatprep.subr.mxu0 %v362
        %520 = vmatpush1.msra.mxu0 %v361
        %521 = vmatprep.subr.mxu0 %v360
        %522 = vmatpush1.msra.mxu0 %v359
        %523 = vmatprep.subr.mxu0 %v358
        %524 = vmatpush1.msra.mxu0 %v357
        %525 = vmatprep.subr.mxu0 %v356
        %526 = vmatpush1.msra.mxu0 %v355
        %527 = vmatprep.subr.mxu0 %v354
        %528 = vmatpush1.msra.mxu0 %v353
        %529 = vmatprep.subr.mxu0 %v352
        %530 = vmatpush1.msra.mxu0 %v351
        %531 = vmatprep.subr.mxu0 %v350
        %532 = vmatpush1.msra.mxu0 %v349
        %533 = vmatprep.subr.mxu0 %v412
        %534 = vmatpush2.msra.mxu0 %v411
        %535 = vmatprep.subr.mxu0 %v410
        %536 = vmatpush2.msra.mxu0 %v409
        %537 = vmatprep.subr.mxu0 %v408
        %538 = vmatpush2.msra.mxu0 %v407
        %539 = vmatprep.subr.mxu0 %v406
        %540 = vmatpush2.msra.mxu0 %v405
        %541 = vmatprep.subr.mxu0 %v404
        %542 = vmatpush2.msra.mxu0 %v403
        %543 = vmatprep.subr.mxu0 %v402
        %544 = vmatpush2.msra.mxu0 %v401
        %545 = vmatprep.subr.mxu0 %v400
        %546 = vmatpush2.msra.mxu0 %v399
        %547 = vmatprep.subr.mxu0 %v398
        %548 = vmatpush2.msra.mxu0 %v397
        %549 = vmatprep.subr.mxu0 %v396
        %550 = vmatpush2.msra.mxu0 %v395
        %551 = vmatprep.subr.mxu0 %v394
        %552 = vmatpush2.msra.mxu0 %v393
        %553 = vmatprep.subr.mxu0 %v392
        %554 = vmatpush2.msra.mxu0 %v391
        %555 = vmatprep.subr.mxu0 %v390
        %556 = vmatpush2.msra.mxu0 %v389
        %557 = vmatprep.subr.mxu0 %v388
        %558 = vmatpush2.msra.mxu0 %v387
        %559 = vmatprep.subr.mxu0 %v386
        %560 = vmatpush2.msra.mxu0 %v385
        %561 = vmatprep.subr.mxu0 %v384
        %562 = vmatpush2.msra.mxu0 %v383
        %563 = vmatprep.subr.mxu0 %v382
        %564 = vmatpush2.msra.mxu0 %v381
        %565 = vmatprep.mubr.f32.mxu0 %v498
        %566 = vmatmul.mubr.f32.gmra.mxu0 %v497
        %v567 = vpop.f32.mrf.mxu0
        %v568 = vadd.f32 0.0, %v567
        %v569 = vpop.f32.mrf.mxu0
        %v570 = vadd.f32 0.0, %v569
        %571 = vdwg.mxu0
        %v572 = vadd.f32 %v499, %v568
        %v573 = vadd.f32 %v500, %v570
        %574 = vst [vmem:[#allocation2] sm:$0xff] %v572
        %575 = vst [vmem:[#allocation2 + $0x8] sm:$0xff] %v573
        %v576 = vld [vmem:[#allocation2] sm:$0xff]
        %v577 = vld [vmem:[#allocation2 + $0x8] sm:$0xff]
        %578 = vst [vmem:[%s269] sm:$0xff] %v576
        %579 = vst [vmem:[%s269 + $0x8] sm:$0xff] %v577
        %s580 = sand.u32 %s141, 1
        %s581 = scalar_lea.sflag [#allocation5], %s580
        %s582 = sand.u32 %s141, 1
        %s583 = smul.addr %s582, 16
        %s584 = scalar_lea.vmem [#allocation9], %s583
        // Predicated region
        $region53: #{tpu_custom_call.1} parent=39 // pred_check
          %p585 = pneg %p151
        $region54: #{tpu_custom_call.1} parent=39 // pred_check_branch
          %587 = sbr.rel (%p585) target = $region56
        $region55: #{tpu_custom_call.1} parent=39 // pred_region
          %s589 = ssub.s32 256, 256
          %590 = vsyncadd %s581, %s589
          %s591 = smul.addr %s23, 2
          %s592 = smul.addr %s591, 128
          %s593 = scalar_lea.hbm %s5, %s592
          %s595 = sshll.u32 %s584, 4
          %s596 = int_to_ptr.vmem [resolvable:$true] %s595
          %598 = dma.vmem_to_hbm [thread:$0]  %s596, 256, %s593, %s581
        $region56: #{tpu_custom_call.1} parent=39 // pred_fallthru
          _
      $region40: #{tpu_custom_call.1} parent=5 // pred_fallthru
        _
      %p599 = scmp.le.s32.totalorder 2, %s18
      // Predicated region
      $region57: #{tpu_custom_call.1} parent=5 // pred_check
        %p600 = pneg %p599
      $region58: #{tpu_custom_call.1} parent=5 // pred_check_branch
        %602 = sbr.rel (%p600) target = $region60
      $region59: #{tpu_custom_call.1} parent=5 // pred_region
        %s603 = ssub.s32 %s18, 2
        // Predicated region
        $region61: #{tpu_custom_call.1} parent=59 // pred_check
          %p604 = pneg %p157
        $region62: #{tpu_custom_call.1} parent=59 // pred_check_branch
          %606 = sbr.rel (%p604) target = $region64
        $region63: #{tpu_custom_call.1} parent=59 // pred_region
          %s607 = sand.u32 %s142, 1
          %s608 = scalar_lea.sflag [#allocation5], %s607
          %s609 = sand.u32 %s142, 1
          %s610 = smul.addr %s609, 16
          %s611 = scalar_lea.vmem [#allocation9], %s610
          %612 = dma.done %s608, 256
        $region64: #{tpu_custom_call.1} parent=59 // pred_fallthru
          _
      $region60: #{tpu_custom_call.1} parent=5 // pred_fallthru
        _
    $region6: #{tpu_custom_call.1} parent=1 // loop_footer
      %s22 = sadd.s32 1, %s18
    $region7: #{tpu_custom_call.1} parent=1 // loop_footer_branch
      %17 = sbr.rel target = $region3
    $region8: #{tpu_custom_call.1} parent=1 // loop_exit
      _
    %613 = vsyncpa [#allocation4], 1
    %s614 = scalar_lea.sflag [#allocation4], 1
    %615 = vsyncpa %s614, 1
    %616 = vsyncpa [#allocation7], 1
    %617 = vsyncpa [#allocation5], 1
    %s618 = scalar_lea.sflag [#allocation5], 1
    %619 = vsyncpa %s618, 1

</llo_original>
